<compile_context>
chip_gen: v5e
topology: v5e:2x2
jax: 0.10.0
libtpu: 0.0.40
codegen_flags: <defaults>
</compile_context>

<pallas_src>
import functools
import math

import jax
import jax.numpy as jnp
from jax.experimental import pallas as pl
from jax.experimental.pallas import tpu as pltpu


def repconv_kernel(x_ref, w_ref, b_ref, o_ref, acc_ref, *, K):
    # x_ref:   (1, TH+K-1, Wp, C1)   haloed input row tile (NHWC)
    # w_ref:   (K*K, C1, TC2)        folded 3x3-equivalent weights, tap-major
    # b_ref:   (1, TC2)              folded bias (f32)
    # o_ref:   (1, TH, Wo, TC2)      output tile
    # acc_ref: (TH*Wo, TC2) f32      VMEM accumulator scratch
    _, TH, WO, TC2 = o_ref.shape
    C1 = x_ref.shape[-1]

    acc_ref[...] = jnp.zeros_like(acc_ref)
    # K*K tap matmuls; taps are accumulated into VMEM scratch so only one
    # (TH*WO, C1) patch slab is live at a time.
    for kh in range(K):
        for kw in range(K):
            patch = x_ref[0, kh:kh + TH, kw:kw + WO, :].reshape(TH * WO, C1)
            acc_ref[...] += jnp.dot(
                patch, w_ref[kh * K + kw],            # native dtype -> MXU
                preferred_element_type=jnp.float32)

    # bias + SiLU epilogue (f32), then cast on store
    y = acc_ref[...] + b_ref[...]
    out = y * (1.0 / (1.0 + jnp.exp(-y)))
    o_ref[...] = out.reshape(1, TH, WO, TC2).astype(o_ref.dtype)


def _fold_conv_bn(w, gamma, beta, mean, var, eps):
    """Fold eval-mode BatchNorm into the conv weight / bias (per RepConv)."""
    std = jnp.sqrt(var + eps)
    scale = gamma / std
    return w * scale.reshape(-1, 1, 1, 1), beta - mean * scale


def repconv_forward(x, conv1_w, bn1, conv2_w, bn2, *, eps=1e-5, tile_h=8):
    """RepConv.forward (eval): SiLU(conv3x3_bn(x) + conv1x1_bn(x)).

    x: (N, C1, H, W) NCHW.  conv1_w: (C2, C1, 3, 3).  conv2_w: (C2, C1, 1, 1).
    bn1/bn2: (gamma, beta, running_mean, running_var) for each branch.
    """
    N, C1, H, W = x.shape
    C2, _, K, _ = conv1_w.shape
    assert K == 3 and conv2_w.shape[2:] == (1, 1)
    # TODO(synk): only stride=1, groups=1, dilation=1 and bn=False (no identity-BN
    # branch) are implemented — the RepConv defaults used by Ultralytics.

    # ---- fold both conv+BN branches into one equivalent 3x3 conv + bias ----
    k3, b3 = _fold_conv_bn(conv1_w, *bn1, eps)
    k1, b1 = _fold_conv_bn(conv2_w, *bn2, eps)
    w_eq = k3 + jnp.pad(k1, ((0, 0), (0, 0), (1, 1), (1, 1)))   # 1x1 -> center tap
    b_eq = (b3 + b1).astype(jnp.float32)

    # ---- tiling / padding choices ----
    p = K // 2
    Ho, Wo = H, W                                   # stride 1, 'same'
    TH = min(tile_h, Ho)                            # output rows per grid step
    n_h = -(-Ho // TH)
    Ho_pad = n_h * TH
    Wo_pad = -(-Wo // 8) * 8                        # sublane-friendly width
    THK = TH + K - 1                                # input rows incl. halo
    Wp_pad = Wo_pad + K - 1
    C2_pad = -(-C2 // 128) * 128                    # lane-dense output channels
    TC2 = 256 if C2_pad % 256 == 0 else 128
    n_c2 = C2_pad // TC2
    NT = N * n_h

    # ---- layout glue: NCHW -> NHWC, spatial pad, halo'd row tiles ----
    x_nhwc = jnp.transpose(x, (0, 2, 3, 1))
    x_pad = jnp.pad(
        x_nhwc, ((0, 0), (p, Ho_pad - H + p), (p, Wo_pad - W + p), (0, 0)))
    # TODO(synk): the halo gather re-reads (K-1)/TH of x through HBM; it could be
    # removed with a pl.Element halo on H (or a manual-DMA pipeline) once validated.
    row_idx = jnp.arange(n_h)[:, None] * TH + jnp.arange(THK)[None, :]
    x_tiles = jnp.take(x_pad, row_idx, axis=1).reshape(NT, THK, Wp_pad, C1)

    w_taps = jnp.transpose(w_eq, (2, 3, 1, 0)).reshape(K * K, C1, C2)
    w_taps = jnp.pad(w_taps, ((0, 0), (0, 0), (0, C2_pad - C2))).astype(x.dtype)
    bias = jnp.pad(b_eq, (0, C2_pad - C2)).reshape(1, C2_pad)

    itemsize = jnp.dtype(x.dtype).itemsize
    cost = pl.CostEstimate(
        flops=2 * NT * TH * Wo_pad * C1 * C2_pad * K * K,
        transcendentals=NT * TH * Wo_pad * C2_pad,
        bytes_accessed=(x_tiles.size * itemsize + w_taps.size * itemsize
                        + NT * TH * Wo_pad * C2_pad * itemsize),
    )

    out = pl.pallas_call(
        functools.partial(repconv_kernel, K=K),
        out_shape=jax.ShapeDtypeStruct((NT, TH, Wo_pad, C2_pad), x.dtype),
        grid=(NT, n_c2),
        in_specs=[
            pl.BlockSpec((1, THK, Wp_pad, C1), lambda i, c: (i, 0, 0, 0)),
            pl.BlockSpec((K * K, C1, TC2), lambda i, c: (0, 0, c)),
            pl.BlockSpec((1, TC2), lambda i, c: (0, c)),
        ],
        out_specs=pl.BlockSpec((1, TH, Wo_pad, TC2), lambda i, c: (i, 0, 0, c)),
        scratch_shapes=[pltpu.VMEM((TH * Wo_pad, TC2), jnp.float32)],
        compiler_params=pltpu.CompilerParams(
            dimension_semantics=("parallel", "parallel")),
        cost_estimate=cost,
    )(x_tiles, w_taps, bias)

    out = out.reshape(N, Ho_pad, Wo_pad, C2_pad)[:, :Ho, :Wo, :C2]
    return jnp.transpose(out, (0, 3, 1, 2))         # back to NCHW


def _reference(x, conv1_w, bn1, conv2_w, bn2, eps=1e-5):
    """Pure-JAX RepConv.forward reference (eval-mode BN, SiLU)."""
    def conv_bn(w, bn, pad):
        g, b, m, v = bn
        y = jax.lax.conv_general_dilated(
            x, w, window_strides=(1, 1), padding=[(pad, pad), (pad, pad)],
            dimension_numbers=("NCHW", "OIHW", "NCHW"))
        scale = (g / jnp.sqrt(v + eps)).reshape(1, -1, 1, 1)
        bias = (b - m * g / jnp.sqrt(v + eps)).reshape(1, -1, 1, 1)
        return y * scale + bias

    y = conv_bn(conv1_w, bn1, 1) + conv_bn(conv2_w, bn2, 0)
    return y * (1.0 / (1.0 + jnp.exp(-y)))           # SiLU


if __name__ == "__main__":
    # RepConv(c1=4, c2=8, k=3, s=1) at small shapes.
    N, C1, H, W = 2, 4, 16, 16
    C2, K = 8, 3

    key = jax.random.PRNGKey(0)
    ks = jax.random.split(key, 5)

    x = jax.random.normal(ks[0], (N, C1, H, W), dtype=jnp.float32)
    conv1_w = jax.random.normal(ks[1], (C2, C1, K, K), jnp.float32) / math.sqrt(C1 * K * K)
    conv2_w = jax.random.normal(ks[2], (C2, C1, 1, 1), jnp.float32) / math.sqrt(C1)

    def bn_params(k):
        kg, kb, km, kv = jax.random.split(k, 4)
        return (1.0 + 0.1 * jax.random.normal(kg, (C2,), jnp.float32),
                0.1 * jax.random.normal(kb, (C2,), jnp.float32),
                0.1 * jax.random.normal(km, (C2,), jnp.float32),
                jax.random.uniform(kv, (C2,), jnp.float32, minval=0.5, maxval=1.5))

    bn1 = bn_params(ks[3])   # BN of the 3x3 branch
    bn2 = bn_params(ks[4])   # BN of the 1x1 branch

    out = repconv_forward(x, conv1_w, bn1, conv2_w, bn2)
    out = jax.block_until_ready(out)

    ref = _reference(x, conv1_w, bn1, conv2_w, bn2)
    assert out.shape == (N, C2, H, W), out.shape
    max_err = float(jnp.max(jnp.abs(out - ref)))
    assert jnp.allclose(out, ref, rtol=2e-4, atol=2e-4), max_err

    print("KERNEL_OK")
</pallas_src>

<mosaic_0001>
module attributes {stable_mosaic.version = 11 : i64} {
  func.func @repconv_kernel(%arg0: i32, %arg1: i32, %arg2: memref<1x10x18x4xf32, #tpu.memory_space<vmem>>, %arg3: memref<9x4x128xf32, #tpu.memory_space<vmem>>, %arg4: memref<1x128xf32, #tpu.memory_space<vmem>>, %arg5: memref<1x8x16x128xf32, #tpu.memory_space<vmem>>, %arg6: memref<128x128xf32, #tpu.memory_space<vmem>>) attributes {dimension_semantics = [#tpu.dimension_semantics<parallel>, #tpu.dimension_semantics<parallel>], iteration_bounds = array<i64: 4, 1>, scalar_prefetch = 0 : i64, scratch_operands = 1 : i64, tpu.core_type = #tpu.core_type<tc>, window_params = [{transform_indices = @transform_0, window_bounds = array<i64: 1, 10, 18, 4>}, {transform_indices = @transform_1, window_bounds = array<i64: 9, 4, 128>}, {transform_indices = @transform_2, window_bounds = array<i64: 1, 128>}, {transform_indices = @transform_3, window_bounds = array<i64: 1, 8, 16, 128>}]} {
    %cst = arith.constant 0.000000e+00 : f32
    %0 = vector.broadcast %cst : f32 to vector<128x128xf32>
    %c0 = arith.constant 0 : index
    %c0_0 = arith.constant 0 : index
    %1 = vector.load %arg6[%c0, %c0_0] : memref<128x128xf32, #tpu.memory_space<vmem>>, vector<128x128xf32>
    tpu.vector_store %arg6[%c0, %c0_0], %0 {strides = array<i32>} : memref<128x128xf32, #tpu.memory_space<vmem>>, vector<128x128xf32>,
    %c0_1 = arith.constant 0 : index
    %c0_2 = arith.constant 0 : index
    %c0_3 = arith.constant 0 : index
    %c0_4 = arith.constant 0 : index
    %2 = vector.load %arg2[%c0_1, %c0_2, %c0_3, %c0_4] : memref<1x10x18x4xf32, #tpu.memory_space<vmem>>, vector<1x8x16x4xf32>
    %3 = vector.shape_cast %2 : vector<1x8x16x4xf32> to vector<8x16x4xf32>
    %4 = vector.shape_cast %3 : vector<8x16x4xf32> to vector<128x4xf32>
    %c0_5 = arith.constant 0 : index
    %c0_6 = arith.constant 0 : index
    %5 = vector.load %arg6[%c0_5, %c0_6] : memref<128x128xf32, #tpu.memory_space<vmem>>, vector<128x128xf32>
    %c0_7 = arith.constant 0 : index
    %c0_8 = arith.constant 0 : index
    %c0_9 = arith.constant 0 : index
    %6 = vector.load %arg3[%c0_7, %c0_8, %c0_9] : memref<9x4x128xf32, #tpu.memory_space<vmem>>, vector<1x4x128xf32>
    %7 = vector.shape_cast %6 : vector<1x4x128xf32> to vector<4x128xf32>
    %cst_10 = arith.constant dense<0.000000e+00> : vector<128x128xf32>
    %8 = tpu.matmul %4, %7, %cst_10 {dimension_numbers = #tpu.dot_dimension_numbers<[1], [0], [0], [1], [0, 0, 1, 1], [], []>} : vector<128x4xf32>, vector<4x128xf32>, vector<128x128xf32> -> vector<128x128xf32>
    %9 = arith.addf %5, %8 : vector<128x128xf32>
    %c0_11 = arith.constant 0 : index
    %c0_12 = arith.constant 0 : index
    %10 = vector.load %arg6[%c0_11, %c0_12] : memref<128x128xf32, #tpu.memory_space<vmem>>, vector<128x128xf32>
    tpu.vector_store %arg6[%c0_11, %c0_12], %9 {strides = array<i32>} : memref<128x128xf32, #tpu.memory_space<vmem>>, vector<128x128xf32>,
    %c0_13 = arith.constant 0 : index
    %c0_14 = arith.constant 0 : index
    %c1 = arith.constant 1 : index
    %c0_15 = arith.constant 0 : index
    %11 = vector.load %arg2[%c0_13, %c0_14, %c1, %c0_15] : memref<1x10x18x4xf32, #tpu.memory_space<vmem>>, vector<1x8x16x4xf32>
    %12 = vector.shape_cast %11 : vector<1x8x16x4xf32> to vector<8x16x4xf32>
    %13 = vector.shape_cast %12 : vector<8x16x4xf32> to vector<128x4xf32>
    %c0_16 = arith.constant 0 : index
    %c0_17 = arith.constant 0 : index
    %14 = vector.load %arg6[%c0_16, %c0_17] : memref<128x128xf32, #tpu.memory_space<vmem>>, vector<128x128xf32>
    %c1_18 = arith.constant 1 : index
    %c0_19 = arith.constant 0 : index
    %c0_20 = arith.constant 0 : index
    %15 = vector.load %arg3[%c1_18, %c0_19, %c0_20] : memref<9x4x128xf32, #tpu.memory_space<vmem>>, vector<1x4x128xf32>
    %16 = vector.shape_cast %15 : vector<1x4x128xf32> to vector<4x128xf32>
    %cst_21 = arith.constant dense<0.000000e+00> : vector<128x128xf32>
    %17 = tpu.matmul %13, %16, %cst_21 {dimension_numbers = #tpu.dot_dimension_numbers<[1], [0], [0], [1], [0, 0, 1, 1], [], []>} : vector<128x4xf32>, vector<4x128xf32>, vector<128x128xf32> -> vector<128x128xf32>
    %18 = arith.addf %14, %17 : vector<128x128xf32>
    %c0_22 = arith.constant 0 : index
    %c0_23 = arith.constant 0 : index
    %19 = vector.load %arg6[%c0_22, %c0_23] : memref<128x128xf32, #tpu.memory_space<vmem>>, vector<128x128xf32>
    tpu.vector_store %arg6[%c0_22, %c0_23], %18 {strides = array<i32>} : memref<128x128xf32, #tpu.memory_space<vmem>>, vector<128x128xf32>,
    %c0_24 = arith.constant 0 : index
    %c0_25 = arith.constant 0 : index
    %c2 = arith.constant 2 : index
    %c0_26 = arith.constant 0 : index
    %20 = vector.load %arg2[%c0_24, %c0_25, %c2, %c0_26] : memref<1x10x18x4xf32, #tpu.memory_space<vmem>>, vector<1x8x16x4xf32>
    %21 = vector.shape_cast %20 : vector<1x8x16x4xf32> to vector<8x16x4xf32>
    %22 = vector.shape_cast %21 : vector<8x16x4xf32> to vector<128x4xf32>
    %c0_27 = arith.constant 0 : index
    %c0_28 = arith.constant 0 : index
    %23 = vector.load %arg6[%c0_27, %c0_28] : memref<128x128xf32, #tpu.memory_space<vmem>>, vector<128x128xf32>
    %c2_29 = arith.constant 2 : index
    %c0_30 = arith.constant 0 : index
    %c0_31 = arith.constant 0 : index
    %24 = vector.load %arg3[%c2_29, %c0_30, %c0_31] : memref<9x4x128xf32, #tpu.memory_space<vmem>>, vector<1x4x128xf32>
    %25 = vector.shape_cast %24 : vector<1x4x128xf32> to vector<4x128xf32>
    %cst_32 = arith.constant dense<0.000000e+00> : vector<128x128xf32>
    %26 = tpu.matmul %22, %25, %cst_32 {dimension_numbers = #tpu.dot_dimension_numbers<[1], [0], [0], [1], [0, 0, 1, 1], [], []>} : vector<128x4xf32>, vector<4x128xf32>, vector<128x128xf32> -> vector<128x128xf32>
    %27 = arith.addf %23, %26 : vector<128x128xf32>
    %c0_33 = arith.constant 0 : index
    %c0_34 = arith.constant 0 : index
    %28 = vector.load %arg6[%c0_33, %c0_34] : memref<128x128xf32, #tpu.memory_space<vmem>>, vector<128x128xf32>
    tpu.vector_store %arg6[%c0_33, %c0_34], %27 {strides = array<i32>} : memref<128x128xf32, #tpu.memory_space<vmem>>, vector<128x128xf32>,
    %c0_35 = arith.constant 0 : index
    %c1_36 = arith.constant 1 : index
    %c0_37 = arith.constant 0 : index
    %c0_38 = arith.constant 0 : index
    %29 = vector.load %arg2[%c0_35, %c1_36, %c0_37, %c0_38] : memref<1x10x18x4xf32, #tpu.memory_space<vmem>>, vector<1x8x16x4xf32>
    %30 = vector.shape_cast %29 : vector<1x8x16x4xf32> to vector<8x16x4xf32>
    %31 = vector.shape_cast %30 : vector<8x16x4xf32> to vector<128x4xf32>
    %c0_39 = arith.constant 0 : index
    %c0_40 = arith.constant 0 : index
    %32 = vector.load %arg6[%c0_39, %c0_40] : memref<128x128xf32, #tpu.memory_space<vmem>>, vector<128x128xf32>
    %c3 = arith.constant 3 : index
    %c0_41 = arith.constant 0 : index
    %c0_42 = arith.constant 0 : index
    %33 = vector.load %arg3[%c3, %c0_41, %c0_42] : memref<9x4x128xf32, #tpu.memory_space<vmem>>, vector<1x4x128xf32>
    %34 = vector.shape_cast %33 : vector<1x4x128xf32> to vector<4x128xf32>
    %cst_43 = arith.constant dense<0.000000e+00> : vector<128x128xf32>
    %35 = tpu.matmul %31, %34, %cst_43 {dimension_numbers = #tpu.dot_dimension_numbers<[1], [0], [0], [1], [0, 0, 1, 1], [], []>} : vector<128x4xf32>, vector<4x128xf32>, vector<128x128xf32> -> vector<128x128xf32>
    %36 = arith.addf %32, %35 : vector<128x128xf32>
    %c0_44 = arith.constant 0 : index
    %c0_45 = arith.constant 0 : index
    %37 = vector.load %arg6[%c0_44, %c0_45] : memref<128x128xf32, #tpu.memory_space<vmem>>, vector<128x128xf32>
    tpu.vector_store %arg6[%c0_44, %c0_45], %36 {strides = array<i32>} : memref<128x128xf32, #tpu.memory_space<vmem>>, vector<128x128xf32>,
    %c0_46 = arith.constant 0 : index
    %c1_47 = arith.constant 1 : index
    %c1_48 = arith.constant 1 : index
    %c0_49 = arith.constant 0 : index
    %38 = vector.load %arg2[%c0_46, %c1_47, %c1_48, %c0_49] : memref<1x10x18x4xf32, #tpu.memory_space<vmem>>, vector<1x8x16x4xf32>
    %39 = vector.shape_cast %38 : vector<1x8x16x4xf32> to vector<8x16x4xf32>
    %40 = vector.shape_cast %39 : vector<8x16x4xf32> to vector<128x4xf32>
    %c0_50 = arith.constant 0 : index
    %c0_51 = arith.constant 0 : index
    %41 = vector.load %arg6[%c0_50, %c0_51] : memref<128x128xf32, #tpu.memory_space<vmem>>, vector<128x128xf32>
    %c4 = arith.constant 4 : index
    %c0_52 = arith.constant 0 : index
    %c0_53 = arith.constant 0 : index
    %42 = vector.load %arg3[%c4, %c0_52, %c0_53] : memref<9x4x128xf32, #tpu.memory_space<vmem>>, vector<1x4x128xf32>
    %43 = vector.shape_cast %42 : vector<1x4x128xf32> to vector<4x128xf32>
    %cst_54 = arith.constant dense<0.000000e+00> : vector<128x128xf32>
    %44 = tpu.matmul %40, %43, %cst_54 {dimension_numbers = #tpu.dot_dimension_numbers<[1], [0], [0], [1], [0, 0, 1, 1], [], []>} : vector<128x4xf32>, vector<4x128xf32>, vector<128x128xf32> -> vector<128x128xf32>
    %45 = arith.addf %41, %44 : vector<128x128xf32>
    %c0_55 = arith.constant 0 : index
    %c0_56 = arith.constant 0 : index
    %46 = vector.load %arg6[%c0_55, %c0_56] : memref<128x128xf32, #tpu.memory_space<vmem>>, vector<128x128xf32>
    tpu.vector_store %arg6[%c0_55, %c0_56], %45 {strides = array<i32>} : memref<128x128xf32, #tpu.memory_space<vmem>>, vector<128x128xf32>,
    %c0_57 = arith.constant 0 : index
    %c1_58 = arith.constant 1 : index
    %c2_59 = arith.constant 2 : index
    %c0_60 = arith.constant 0 : index
    %47 = vector.load %arg2[%c0_57, %c1_58, %c2_59, %c0_60] : memref<1x10x18x4xf32, #tpu.memory_space<vmem>>, vector<1x8x16x4xf32>
    %48 = vector.shape_cast %47 : vector<1x8x16x4xf32> to vector<8x16x4xf32>
    %49 = vector.shape_cast %48 : vector<8x16x4xf32> to vector<128x4xf32>
    %c0_61 = arith.constant 0 : index
    %c0_62 = arith.constant 0 : index
    %50 = vector.load %arg6[%c0_61, %c0_62] : memref<128x128xf32, #tpu.memory_space<vmem>>, vector<128x128xf32>
    %c5 = arith.constant 5 : index
    %c0_63 = arith.constant 0 : index
    %c0_64 = arith.constant 0 : index
    %51 = vector.load %arg3[%c5, %c0_63, %c0_64] : memref<9x4x128xf32, #tpu.memory_space<vmem>>, vector<1x4x128xf32>
    %52 = vector.shape_cast %51 : vector<1x4x128xf32> to vector<4x128xf32>
    %cst_65 = arith.constant dense<0.000000e+00> : vector<128x128xf32>
    %53 = tpu.matmul %49, %52, %cst_65 {dimension_numbers = #tpu.dot_dimension_numbers<[1], [0], [0], [1], [0, 0, 1, 1], [], []>} : vector<128x4xf32>, vector<4x128xf32>, vector<128x128xf32> -> vector<128x128xf32>
    %54 = arith.addf %50, %53 : vector<128x128xf32>
    %c0_66 = arith.constant 0 : index
    %c0_67 = arith.constant 0 : index
    %55 = vector.load %arg6[%c0_66, %c0_67] : memref<128x128xf32, #tpu.memory_space<vmem>>, vector<128x128xf32>
    tpu.vector_store %arg6[%c0_66, %c0_67], %54 {strides = array<i32>} : memref<128x128xf32, #tpu.memory_space<vmem>>, vector<128x128xf32>,
    %c0_68 = arith.constant 0 : index
    %c2_69 = arith.constant 2 : index
    %c0_70 = arith.constant 0 : index
    %c0_71 = arith.constant 0 : index
    %56 = vector.load %arg2[%c0_68, %c2_69, %c0_70, %c0_71] : memref<1x10x18x4xf32, #tpu.memory_space<vmem>>, vector<1x8x16x4xf32>
    %57 = vector.shape_cast %56 : vector<1x8x16x4xf32> to vector<8x16x4xf32>
    %58 = vector.shape_cast %57 : vector<8x16x4xf32> to vector<128x4xf32>
    %c0_72 = arith.constant 0 : index
    %c0_73 = arith.constant 0 : index
    %59 = vector.load %arg6[%c0_72, %c0_73] : memref<128x128xf32, #tpu.memory_space<vmem>>, vector<128x128xf32>
    %c6 = arith.constant 6 : index
    %c0_74 = arith.constant 0 : index
    %c0_75 = arith.constant 0 : index
    %60 = vector.load %arg3[%c6, %c0_74, %c0_75] : memref<9x4x128xf32, #tpu.memory_space<vmem>>, vector<1x4x128xf32>
    %61 = vector.shape_cast %60 : vector<1x4x128xf32> to vector<4x128xf32>
    %cst_76 = arith.constant dense<0.000000e+00> : vector<128x128xf32>
    %62 = tpu.matmul %58, %61, %cst_76 {dimension_numbers = #tpu.dot_dimension_numbers<[1], [0], [0], [1], [0, 0, 1, 1], [], []>} : vector<128x4xf32>, vector<4x128xf32>, vector<128x128xf32> -> vector<128x128xf32>
    %63 = arith.addf %59, %62 : vector<128x128xf32>
    %c0_77 = arith.constant 0 : index
    %c0_78 = arith.constant 0 : index
    %64 = vector.load %arg6[%c0_77, %c0_78] : memref<128x128xf32, #tpu.memory_space<vmem>>, vector<128x128xf32>
    tpu.vector_store %arg6[%c0_77, %c0_78], %63 {strides = array<i32>} : memref<128x128xf32, #tpu.memory_space<vmem>>, vector<128x128xf32>,
    %c0_79 = arith.constant 0 : index
    %c2_80 = arith.constant 2 : index
    %c1_81 = arith.constant 1 : index
    %c0_82 = arith.constant 0 : index
    %65 = vector.load %arg2[%c0_79, %c2_80, %c1_81, %c0_82] : memref<1x10x18x4xf32, #tpu.memory_space<vmem>>, vector<1x8x16x4xf32>
    %66 = vector.shape_cast %65 : vector<1x8x16x4xf32> to vector<8x16x4xf32>
    %67 = vector.shape_cast %66 : vector<8x16x4xf32> to vector<128x4xf32>
    %c0_83 = arith.constant 0 : index
    %c0_84 = arith.constant 0 : index
    %68 = vector.load %arg6[%c0_83, %c0_84] : memref<128x128xf32, #tpu.memory_space<vmem>>, vector<128x128xf32>
    %c7 = arith.constant 7 : index
    %c0_85 = arith.constant 0 : index
    %c0_86 = arith.constant 0 : index
    %69 = vector.load %arg3[%c7, %c0_85, %c0_86] : memref<9x4x128xf32, #tpu.memory_space<vmem>>, vector<1x4x128xf32>
    %70 = vector.shape_cast %69 : vector<1x4x128xf32> to vector<4x128xf32>
    %cst_87 = arith.constant dense<0.000000e+00> : vector<128x128xf32>
    %71 = tpu.matmul %67, %70, %cst_87 {dimension_numbers = #tpu.dot_dimension_numbers<[1], [0], [0], [1], [0, 0, 1, 1], [], []>} : vector<128x4xf32>, vector<4x128xf32>, vector<128x128xf32> -> vector<128x128xf32>
    %72 = arith.addf %68, %71 : vector<128x128xf32>
    %c0_88 = arith.constant 0 : index
    %c0_89 = arith.constant 0 : index
    %73 = vector.load %arg6[%c0_88, %c0_89] : memref<128x128xf32, #tpu.memory_space<vmem>>, vector<128x128xf32>
    tpu.vector_store %arg6[%c0_88, %c0_89], %72 {strides = array<i32>} : memref<128x128xf32, #tpu.memory_space<vmem>>, vector<128x128xf32>,
    %c0_90 = arith.constant 0 : index
    %c2_91 = arith.constant 2 : index
    %c2_92 = arith.constant 2 : index
    %c0_93 = arith.constant 0 : index
    %74 = vector.load %arg2[%c0_90, %c2_91, %c2_92, %c0_93] : memref<1x10x18x4xf32, #tpu.memory_space<vmem>>, vector<1x8x16x4xf32>
    %75 = vector.shape_cast %74 : vector<1x8x16x4xf32> to vector<8x16x4xf32>
    %76 = vector.shape_cast %75 : vector<8x16x4xf32> to vector<128x4xf32>
    %c0_94 = arith.constant 0 : index
    %c0_95 = arith.constant 0 : index
    %77 = vector.load %arg6[%c0_94, %c0_95] : memref<128x128xf32, #tpu.memory_space<vmem>>, vector<128x128xf32>
    %c8 = arith.constant 8 : index
    %c0_96 = arith.constant 0 : index
    %c0_97 = arith.constant 0 : index
    %78 = vector.load %arg3[%c8, %c0_96, %c0_97] : memref<9x4x128xf32, #tpu.memory_space<vmem>>, vector<1x4x128xf32>
    %79 = vector.shape_cast %78 : vector<1x4x128xf32> to vector<4x128xf32>
    %cst_98 = arith.constant dense<0.000000e+00> : vector<128x128xf32>
    %80 = tpu.matmul %76, %79, %cst_98 {dimension_numbers = #tpu.dot_dimension_numbers<[1], [0], [0], [1], [0, 0, 1, 1], [], []>} : vector<128x4xf32>, vector<4x128xf32>, vector<128x128xf32> -> vector<128x128xf32>
    %81 = arith.addf %77, %80 : vector<128x128xf32>
    %c0_99 = arith.constant 0 : index
    %c0_100 = arith.constant 0 : index
    %82 = vector.load %arg6[%c0_99, %c0_100] : memref<128x128xf32, #tpu.memory_space<vmem>>, vector<128x128xf32>
    tpu.vector_store %arg6[%c0_99, %c0_100], %81 {strides = array<i32>} : memref<128x128xf32, #tpu.memory_space<vmem>>, vector<128x128xf32>,
    %c0_101 = arith.constant 0 : index
    %c0_102 = arith.constant 0 : index
    %83 = vector.load %arg6[%c0_101, %c0_102] : memref<128x128xf32, #tpu.memory_space<vmem>>, vector<128x128xf32>
    %c0_103 = arith.constant 0 : index
    %c0_104 = arith.constant 0 : index
    %84 = vector.load %arg4[%c0_103, %c0_104] : memref<1x128xf32, #tpu.memory_space<vmem>>, vector<1x128xf32>
    %85 = vector.broadcast %84 : vector<1x128xf32> to vector<128x128xf32>
    %86 = arith.addf %83, %85 : vector<128x128xf32>
    %cst_105 = arith.constant 0.000000e+00 : f32
    %87 = vector.broadcast %cst_105 : f32 to vector<128x128xf32>
    %88 = arith.subf %87, %86 : vector<128x128xf32>
    %89 = math.exp %88 : vector<128x128xf32>
    %cst_106 = arith.constant 1.000000e+00 : f32
    %90 = vector.broadcast %cst_106 : f32 to vector<128x128xf32>
    %91 = arith.addf %90, %89 : vector<128x128xf32>
    %cst_107 = arith.constant 1.000000e+00 : f32
    %92 = vector.broadcast %cst_107 : f32 to vector<128x128xf32>
    %93 = arith.divf %92, %91 : vector<128x128xf32>
    %94 = arith.mulf %86, %93 : vector<128x128xf32>
    %95 = vector.shape_cast %94 : vector<128x128xf32> to vector<1x8x16x128xf32>
    %c0_108 = arith.constant 0 : index
    %c0_109 = arith.constant 0 : index
    %c0_110 = arith.constant 0 : index
    %c0_111 = arith.constant 0 : index
    %96 = vector.load %arg5[%c0_108, %c0_109, %c0_110, %c0_111] : memref<1x8x16x128xf32, #tpu.memory_space<vmem>>, vector<1x8x16x128xf32>
    tpu.vector_store %arg5[%c0_108, %c0_109, %c0_110, %c0_111], %95 {strides = array<i32>} : memref<1x8x16x128xf32, #tpu.memory_space<vmem>>, vector<1x8x16x128xf32>,
    return
  }
  func.func @transform_0(%arg0: i32, %arg1: i32) -> (i32, i32, i32, i32) {
    %c0_i32 = arith.constant 0 : i32
    %c0_i32_0 = arith.constant 0 : i32
    %c0_i32_1 = arith.constant 0 : i32
    %c0_i32_2 = arith.constant 0 : i32
    return %arg0, %c0_i32, %c0_i32_0, %c0_i32_1 : i32, i32, i32, i32
  }
  func.func @transform_1(%arg0: i32, %arg1: i32) -> (i32, i32, i32) {
    %c0_i32 = arith.constant 0 : i32
    %c0_i32_0 = arith.constant 0 : i32
    %c0_i32_1 = arith.constant 0 : i32
    return %c0_i32, %c0_i32_0, %arg1 : i32, i32, i32
  }
  func.func @transform_2(%arg0: i32, %arg1: i32) -> (i32, i32) {
    %c0_i32 = arith.constant 0 : i32
    %c0_i32_0 = arith.constant 0 : i32
    return %c0_i32, %arg1 : i32, i32
  }
  func.func @transform_3(%arg0: i32, %arg1: i32) -> (i32, i32, i32, i32) {
    %c0_i32 = arith.constant 0 : i32
    %c0_i32_0 = arith.constant 0 : i32
    %c0_i32_1 = arith.constant 0 : i32
    return %arg0, %c0_i32, %c0_i32_0, %arg1 : i32, i32, i32, i32
  }
}

</mosaic_0001>

<llo_original>
// kernel: tpu_custom_call.1
$region0: #{tpu_custom_call.1}
  #allocation0 [shape = 'u32[]', space=smem, size = 0x4, offset = 0x4, fixed_abs, tag = 'smem constant byte address 0x4 - core index']
  #allocation1 [shape = 'u32[72,128]{1,0:T(1,128)}', space=vmem, size = 0x9000, scoped, tag = 'internal scratch']
  #allocation2 [shape = 'f32[128,128]{1,0:T(8,128)}', space=vmem, size = 0x10000, scoped, tag = 'scratch operand']
  %s0 = inlined_call_operand.vmem [shape: f32[4,10,18,4], index: 0, kind: input, shape index: {}]
  %s1 = inlined_call_operand.vmem [shape: f32[9,4,128], index: 1, kind: input, shape index: {}]
  %s2 = inlined_call_operand.vmem [shape: f32[1,128], index: 2, kind: input, shape index: {}]
  %s3 = inlined_call_operand.hbm [shape: f32[4,8,16,128], index: 3, kind: output, shape index: {}]
  %s4 = sld [smem:[#allocation0]]
  $region45: #{tpu_custom_call.1} parent=0
    _
  %s6 = ssub.s32 1, %s4
  %s7 = scalar_select 0, %s6, %s4
  $region1: #{tpu_custom_call.1} parent=0
    #allocation3 [shape = 'u8[131072]{0}', space=vmem, size = 0x20000, scoped, tag = 'output window, operand 0']
    #allocation4 [shape = 's32[2]{0}', space=sflag, size = 0x8, scoped, tag = 'scoped memory for tpu_custom_call.1']
    %8 = vsyncpa [#allocation4], 0
    %s9 = scalar_lea.sflag [#allocation4], 1
    %10 = vsyncpa %s9, 0
    loop: start=0, step=1, limit=6
    $region2: #{tpu_custom_call.1} parent=1 // loop_pre_header
      _
    $region3: #{tpu_custom_call.1} parent=1 // loop_header
      %s12 = sphi 0, %s16
      %p13 = scmp.ge.s32.totalorder %s12, 6
      %s19 = sphi 0, %s31
      %s20 = sphi 0, %s27
      %s21 = sphi 0, %s19
      %s22 = sphi 0, %s20
      %s23 = sphi 0, %s21
      %s24 = sphi 0, %s22
      %s34 = sphi 0, %s36
      %s37 = sphi 0, %s34
      %s38 = sphi 0, %s37
      %s54 = sphi 0, %s38
      %s60 = sphi 0, %s62
      %s63 = sphi 0, %s60
      %s64 = sphi 0, %s63
      %s80 = sphi 0, %s64
      %s86 = sphi 0, %s88
      %s89 = sphi 0, %s86
      %s90 = sphi 0, %s89
      %s106 = sphi 0, %s90
      %s114 = sphi 0, %s116
      %s117 = sphi 0, %s114
      %s118 = sphi 0, %s117
      %s134 = sphi 0, %s118
    $region4: #{tpu_custom_call.1} parent=1 // loop_header_branch
      %15 = sbr.rel (%p13) target = $region8
    $region5: #{tpu_custom_call.1} parent=1 // loop_body
      %s17 = ssub.s32 %s12, 1
      %s18 = ssub.s32 %s12, 2
      %s25 = sadd.s32 1, %s20
      %p26 = scmp.ge.s32.totalorder %s25, 1
      %s27 = scalar_select %p26, 0, %s25
      %s28 = sadd.s32 1, %s19
      %s29 = scalar_select %p26, %s28, %s19
      %p30 = scmp.ge.s32.totalorder %s29, 4
      %s31 = scalar_select %p30, 0, %s29
      %s32 = ssub.s32 %s19, %s31
      %p33 = scmp.eq.s32.totalorder %s32, 0
      %s35 = sadd.s32 %s34, 1
      %s36 = scalar_select %p33, %s34, %s35
      %p39 = pneg %p33
      %p40 = scmp.eq.s32.totalorder %s12, 3
      %p41 = por %p39, %p40
      %p42 = scmp.ne.s32.totalorder %s34, %s37
      %p43 = scmp.eq.s32.totalorder %s12, 0
      %p44 = por %p42, %p43
      %p45 = scmp.ne.s32.totalorder %s34, %s37
      %p46 = scmp.eq.s32.totalorder %s17, 3
      %p47 = por %p45, %p46
      %p48 = scmp.ne.s32.totalorder %s37, %s38
      %p49 = scmp.eq.s32.totalorder %s17, 0
      %p50 = por %p48, %p49
      %p51 = scmp.ne.s32.totalorder %s37, %s38
      %p52 = scmp.eq.s32.totalorder %s18, 3
      %p53 = por %p51, %p52
      %p55 = scmp.ne.s32.totalorder %s38, %s54
      %p56 = scmp.eq.s32.totalorder %s18, 0
      %p57 = por %p55, %p56
      %s58 = ssub.s32 %s20, %s27
      %p59 = scmp.eq.s32.totalorder %s58, 0
      %s61 = sadd.s32 %s60, 1
      %s62 = scalar_select %p59, %s60, %s61
      %p65 = pneg %p59
      %p66 = scmp.eq.s32.totalorder %s12, 3
      %p67 = por %p65, %p66
      %p68 = scmp.ne.s32.totalorder %s60, %s63
      %p69 = scmp.eq.s32.totalorder %s12, 0
      %p70 = por %p68, %p69
      %p71 = scmp.ne.s32.totalorder %s60, %s63
      %p72 = scmp.eq.s32.totalorder %s17, 3
      %p73 = por %p71, %p72
      %p74 = scmp.ne.s32.totalorder %s63, %s64
      %p75 = scmp.eq.s32.totalorder %s17, 0
      %p76 = por %p74, %p75
      %p77 = scmp.ne.s32.totalorder %s63, %s64
      %p78 = scmp.eq.s32.totalorder %s18, 3
      %p79 = por %p77, %p78
      %p81 = scmp.ne.s32.totalorder %s64, %s80
      %p82 = scmp.eq.s32.totalorder %s18, 0
      %p83 = por %p81, %p82
      %s84 = ssub.s32 %s20, %s27
      %p85 = scmp.eq.s32.totalorder %s84, 0
      %s87 = sadd.s32 %s86, 1
      %s88 = scalar_select %p85, %s86, %s87
      %p91 = pneg %p85
      %p92 = scmp.eq.s32.totalorder %s12, 3
      %p93 = por %p91, %p92
      %p94 = scmp.ne.s32.totalorder %s86, %s89
      %p95 = scmp.eq.s32.totalorder %s12, 0
      %p96 = por %p94, %p95
      %p97 = scmp.ne.s32.totalorder %s86, %s89
      %p98 = scmp.eq.s32.totalorder %s17, 3
      %p99 = por %p97, %p98
      %p100 = scmp.ne.s32.totalorder %s89, %s90
      %p101 = scmp.eq.s32.totalorder %s17, 0
      %p102 = por %p100, %p101
      %p103 = scmp.ne.s32.totalorder %s89, %s90
      %p104 = scmp.eq.s32.totalorder %s18, 3
      %p105 = por %p103, %p104
      %p107 = scmp.ne.s32.totalorder %s90, %s106
      %p108 = scmp.eq.s32.totalorder %s18, 0
      %p109 = por %p107, %p108
      %s110 = ssub.s32 %s19, %s31
      %s111 = ssub.s32 %s20, %s27
      %s112 = sor.u32 %s110, %s111
      %p113 = scmp.eq.s32.totalorder %s112, 0
      %s115 = sadd.s32 %s114, 1
      %s116 = scalar_select %p113, %s114, %s115
      %p119 = pneg %p113
      %p120 = scmp.eq.s32.totalorder %s12, 3
      %p121 = por %p119, %p120
      %p122 = scmp.ne.s32.totalorder %s114, %s117
      %p123 = scmp.eq.s32.totalorder %s12, 0
      %p124 = por %p122, %p123
      %p125 = scmp.ne.s32.totalorder %s114, %s117
      %p126 = scmp.eq.s32.totalorder %s17, 3
      %p127 = por %p125, %p126
      %p128 = scmp.ne.s32.totalorder %s117, %s118
      %p129 = scmp.eq.s32.totalorder %s17, 0
      %p130 = por %p128, %p129
      %p131 = scmp.ne.s32.totalorder %s117, %s118
      %p132 = scmp.eq.s32.totalorder %s18, 3
      %p133 = por %p131, %p132
      %p135 = scmp.ne.s32.totalorder %s118, %s134
      %p136 = scmp.eq.s32.totalorder %s18, 0
      %p137 = por %p135, %p136
      %p138 = scmp.le.s32.totalorder 1, %s12
      %p139 = scmp.lt.s32.totalorder %s12, 5
      %p140 = pnand %p138, %p139
      %p141 = pneg %p140
      // Predicated region
      $region9: #{tpu_custom_call.1} parent=5 // pred_check
        _
      $region10: #{tpu_custom_call.1} parent=5 // pred_check_branch
        %143 = sbr.rel (%p140) target = $region12
      $region11: #{tpu_custom_call.1} parent=5 // pred_region
        %s144 = ssub.s32 %s12, 1
        // Predicated region
        $region13: #{tpu_custom_call.1} parent=11 // pred_check
          %p145 = pneg %p76
        $region14: #{tpu_custom_call.1} parent=11 // pred_check_branch
          %147 = sbr.rel (%p145) target = $region16
        $region15: #{tpu_custom_call.1} parent=11 // pred_region
          %p148 = scmp.lt.s32.totalorder %s22, 0
          %s149 = scalar_select %p148, %s22, 0
          %s150 = smul.addr %s149, 4
          %s151 = scalar_lea.vmem %s1, %s150
        $region16: #{tpu_custom_call.1} parent=11 // pred_fallthru
          _
        // Predicated region
        $region17: #{tpu_custom_call.1} parent=11 // pred_check
          %p152 = pneg %p102
        $region18: #{tpu_custom_call.1} parent=11 // pred_check_branch
          %154 = sbr.rel (%p152) target = $region20
        $region19: #{tpu_custom_call.1} parent=11 // pred_region
          %p155 = scmp.lt.s32.totalorder %s22, 0
          %s156 = scalar_select %p155, %s22, 0
          %s157 = scalar_lea.vmem %s2, %s156
        $region20: #{tpu_custom_call.1} parent=11 // pred_fallthru
          _
      $region12: #{tpu_custom_call.1} parent=5 // pred_fallthru
        _
      %p158 = scmp.lt.s32.totalorder %s12, 4
      // Predicated region
      $region21: #{tpu_custom_call.1} parent=5 // pred_check
        %p159 = pneg %p158
      $region22: #{tpu_custom_call.1} parent=5 // pred_check_branch
        %161 = sbr.rel (%p159) target = $region24
      $region23: #{tpu_custom_call.1} parent=5 // pred_region
        // Predicated region
        $region25: #{tpu_custom_call.1} parent=23 // pred_check
          %p162 = pneg %p44
        $region26: #{tpu_custom_call.1} parent=23 // pred_check_branch
          %164 = sbr.rel (%p162) target = $region28
        $region27: #{tpu_custom_call.1} parent=23 // pred_region
          %p165 = scmp.lt.s32.totalorder %s19, 3
          %s166 = scalar_select %p165, %s19, 3
          %s167 = smul.addr %s166, 30
          %s168 = smul.addr %s167, 8
          %s169 = scalar_lea.vmem %s0, %s168
        $region28: #{tpu_custom_call.1} parent=23 // pred_fallthru
          _
      $region24: #{tpu_custom_call.1} parent=5 // pred_fallthru
        _
      %p170 = scmp.le.s32.totalorder 1, %s12
      %p171 = scmp.lt.s32.totalorder %s12, 5
      %p172 = pnand %p170, %p171
      %p173 = pneg %p172
      // Predicated region
      $region29: #{tpu_custom_call.1} parent=5 // pred_check
        _
      $region30: #{tpu_custom_call.1} parent=5 // pred_check_branch
        %175 = sbr.rel (%p172) target = $region32
      $region31: #{tpu_custom_call.1} parent=5 // pred_region
        %s176 = ssub.s32 %s12, 1
        %p177 = scmp.lt.s32.totalorder %s21, 3
        %s178 = scalar_select %p177, %s21, 3
        %s179 = smul.addr %s178, 30
        %s180 = smul.addr %s179, 8
        %s181 = scalar_lea.vmem %s0, %s180
        %p182 = pneg %p50
        %p183 = pneg %p47
        %p184 = scmp.lt.s32.totalorder %s22, 0
        %s185 = scalar_select %p184, %s22, 0
        %s186 = smul.addr %s185, 4
        %s187 = scalar_lea.vmem %s1, %s186
        %p188 = pneg %p76
        %p189 = pneg %p73
        %p190 = scmp.lt.s32.totalorder %s22, 0
        %s191 = scalar_select %p190, %s22, 0
        %s192 = scalar_lea.vmem %s2, %s191
        %p193 = pneg %p102
        %p194 = pneg %p99
        %p195 = pneg %p130
        %p196 = pneg %p127
        %s197 = sand.u32 %s117, 1
        %s198 = scalar_lea.sflag [#allocation4], %s197
        %s199 = sand.u32 %s117, 1
        %s200 = smul.addr %s199, 128
        %s201 = scalar_lea.vmem [#allocation3], %s200
        %p202 = scmp.lt.s32.totalorder %s21, 3
        %s203 = scalar_select %p202, %s21, 3
        %s204 = smul.addr %s203, 30
        %s205 = smul.addr %s204, 8
        %s206 = scalar_lea.vmem %s0, %s205
        %p207 = scmp.lt.s32.totalorder %s22, 0
        %s208 = scalar_select %p207, %s22, 0
        %s209 = smul.addr %s208, 4
        %s210 = scalar_lea.vmem %s1, %s209
        %p211 = scmp.lt.s32.totalorder %s22, 0
        %s212 = scalar_select %p211, %s22, 0
        %s213 = scalar_lea.vmem %s2, %s212
        %214 = vst [vmem:[#allocation2] sm:$0xff] 0.0
        %215 = vst [vmem:[#allocation2 + $0x8] sm:$0xff] 0.0
        %216 = vst [vmem:[#allocation2 + $0x10] sm:$0xff] 0.0
        %217 = vst [vmem:[#allocation2 + $0x18] sm:$0xff] 0.0
        %218 = vst [vmem:[#allocation2 + $0x20] sm:$0xff] 0.0
        %219 = vst [vmem:[#allocation2 + $0x28] sm:$0xff] 0.0
        %220 = vst [vmem:[#allocation2 + $0x30] sm:$0xff] 0.0
        %221 = vst [vmem:[#allocation2 + $0x38] sm:$0xff] 0.0
        %222 = vst [vmem:[#allocation2 + $0x40] sm:$0xff] 0.0
        %223 = vst [vmem:[#allocation2 + $0x48] sm:$0xff] 0.0
        %224 = vst [vmem:[#allocation2 + $0x50] sm:$0xff] 0.0
        %225 = vst [vmem:[#allocation2 + $0x58] sm:$0xff] 0.0
        %226 = vst [vmem:[#allocation2 + $0x60] sm:$0xff] 0.0
        %227 = vst [vmem:[#allocation2 + $0x68] sm:$0xff] 0.0
        %228 = vst [vmem:[#allocation2 + $0x70] sm:$0xff] 0.0
        %229 = vst [vmem:[#allocation2 + $0x78] sm:$0xff] 0.0
        %v230 = vld [vmem:[%s206] sm:$0xff]
        %v231 = vld [vmem:[%s206 + $0x8] sm:$0xff]
        %v232 = vld [vmem:[%s206 + $0x18] sm:$0xff]
        %v233 = vld [vmem:[%s206 + $0x20] sm:$0xff]
        %v234 = vld [vmem:[%s206 + $0x30] sm:$0xff]
        %v235 = vld [vmem:[%s206 + $0x38] sm:$0xff]
        %v236 = vld [vmem:[%s206 + $0x48] sm:$0xff]
        %v237 = vld [vmem:[%s206 + $0x50] sm:$0xff]
        %v238 = vld [vmem:[%s206 + $0x60] sm:$0xff]
        %v239 = vld [vmem:[%s206 + $0x68] sm:$0xff]
        %v240 = vld [vmem:[%s206 + $0x78] sm:$0xff]
        %v241 = vld [vmem:[%s206 + $0x80] sm:$0xff]
        %v242 = vld [vmem:[%s206 + $0x90] sm:$0xff]
        %v243 = vld [vmem:[%s206 + $0x98] sm:$0xff]
        %v244 = vld [vmem:[%s206 + $0xa8] sm:$0xff]
        %v245 = vld [vmem:[%s206 + $0xb0] sm:$0xff]
        %v246 = vld [vmem:[#allocation2] sm:$0xff]
        %v247 = vld [vmem:[#allocation2 + $0x8] sm:$0xff]
        %v248 = vld [vmem:[#allocation2 + $0x10] sm:$0xff]
        %v249 = vld [vmem:[#allocation2 + $0x18] sm:$0xff]
        %v250 = vld [vmem:[#allocation2 + $0x20] sm:$0xff]
        %v251 = vld [vmem:[#allocation2 + $0x28] sm:$0xff]
        %v252 = vld [vmem:[#allocation2 + $0x30] sm:$0xff]
        %v253 = vld [vmem:[#allocation2 + $0x38] sm:$0xff]
        %v254 = vld [vmem:[#allocation2 + $0x40] sm:$0xff]
        %v255 = vld [vmem:[#allocation2 + $0x48] sm:$0xff]
        %v256 = vld [vmem:[#allocation2 + $0x50] sm:$0xff]
        %v257 = vld [vmem:[#allocation2 + $0x58] sm:$0xff]
        %v258 = vld [vmem:[#allocation2 + $0x60] sm:$0xff]
        %v259 = vld [vmem:[#allocation2 + $0x68] sm:$0xff]
        %v260 = vld [vmem:[#allocation2 + $0x70] sm:$0xff]
        %v261 = vld [vmem:[#allocation2 + $0x78] sm:$0xff]
        %v262 = vld [vmem:[%s210] sm:$0xf]
        %vm263 = vcmask 31744
        %v265 = vsel %vm263, %v230, 0
        %v268 = vsel %vm263, %v231, 0
        %v271 = vsel %vm263, %v232, 0
        %v274 = vsel %vm263, %v233, 0
        %v277 = vsel %vm263, %v234, 0
        %v280 = vsel %vm263, %v235, 0
        %v283 = vsel %vm263, %v236, 0
        %v286 = vsel %vm263, %v237, 0
        %v289 = vsel %vm263, %v238, 0
        %v292 = vsel %vm263, %v239, 0
        %v295 = vsel %vm263, %v240, 0
        %v298 = vsel %vm263, %v241, 0
        %v301 = vsel %vm263, %v242, 0
        %v304 = vsel %vm263, %v243, 0
        %v307 = vsel %vm263, %v244, 0
        %v310 = vsel %vm263, %v245, 0
        %vm312 = vcmask 1043456
        %v314 = vsel %vm312, %v262, 0
        %316 = vmatpush.msra.mxu0 0.0
        %317 = vmatpush.msra.mxu0 0.0
        %318 = vmatpush.msra.mxu0 0.0
        %319 = vmatpush.msra.mxu0 0.0
        %320 = vmatpush.msra.mxu0 0.0
        %321 = vmatpush.msra.mxu0 0.0
        %322 = vmatpush.msra.mxu0 0.0
        %323 = vmatpush.msra.mxu0 0.0
        %324 = vmatpush.msra.mxu0 0.0
        %325 = vmatpush.msra.mxu0 0.0
        %326 = vmatpush.msra.mxu0 0.0
        %327 = vmatpush.msra.mxu0 0.0
        %328 = vmatpush.msra.mxu0 0.0
        %329 = vmatpush.msra.mxu0 0.0
        %330 = vmatpush.msra.mxu0 0.0
        %331 = vmatpush.msra.mxu0 %v314
        %332 = vmatmul.f32.gmra.mxu0 %v265
        %v333 = vpop.f32.mrf.mxu0
        %v334 = vadd.f32 0.0, %v333
        %335 = vmatmul.f32.gmra.mxu0 %v268
        %v336 = vpop.f32.mrf.mxu0
        %v337 = vadd.f32 0.0, %v336
        %338 = vmatmul.f32.gmra.mxu0 %v271
        %v339 = vpop.f32.mrf.mxu0
        %v340 = vadd.f32 0.0, %v339
        %341 = vmatmul.f32.gmra.mxu0 %v274
        %v342 = vpop.f32.mrf.mxu0
        %v343 = vadd.f32 0.0, %v342
        %344 = vmatmul.f32.gmra.mxu0 %v277
        %v345 = vpop.f32.mrf.mxu0
        %v346 = vadd.f32 0.0, %v345
        %347 = vmatmul.f32.gmra.mxu0 %v280
        %v348 = vpop.f32.mrf.mxu0
        %v349 = vadd.f32 0.0, %v348
        %350 = vmatmul.f32.gmra.mxu0 %v283
        %v351 = vpop.f32.mrf.mxu0
        %v352 = vadd.f32 0.0, %v351
        %353 = vmatmul.f32.gmra.mxu0 %v286
        %v354 = vpop.f32.mrf.mxu0
        %v355 = vadd.f32 0.0, %v354
        %356 = vmatmul.f32.gmra.mxu0 %v289
        %v357 = vpop.f32.mrf.mxu0
        %v358 = vadd.f32 0.0, %v357
        %359 = vmatmul.f32.gmra.mxu0 %v292
        %v360 = vpop.f32.mrf.mxu0
        %v361 = vadd.f32 0.0, %v360
        %362 = vmatmul.f32.gmra.mxu0 %v295
        %v363 = vpop.f32.mrf.mxu0
        %v364 = vadd.f32 0.0, %v363
        %365 = vmatmul.f32.gmra.mxu0 %v298
        %v366 = vpop.f32.mrf.mxu0
        %v367 = vadd.f32 0.0, %v366
        %368 = vmatmul.f32.gmra.mxu0 %v301
        %v369 = vpop.f32.mrf.mxu0
        %v370 = vadd.f32 0.0, %v369
        %371 = vmatmul.f32.gmra.mxu0 %v304
        %v372 = vpop.f32.mrf.mxu0
        %v373 = vadd.f32 0.0, %v372
        %374 = vmatmul.f32.gmra.mxu0 %v307
        %v375 = vpop.f32.mrf.mxu0
        %v376 = vadd.f32 0.0, %v375
        %377 = vmatmul.f32.gmra.mxu0 %v310
        %v378 = vpop.f32.mrf.mxu0
        %v379 = vadd.f32 0.0, %v378
        %380 = vdwg.mxu0
        %v381 = vadd.f32 %v246, %v334
        %v382 = vadd.f32 %v247, %v337
        %v383 = vadd.f32 %v248, %v340
        %v384 = vadd.f32 %v249, %v343
        %v385 = vadd.f32 %v250, %v346
        %v386 = vadd.f32 %v251, %v349
        %v387 = vadd.f32 %v252, %v352
        %v388 = vadd.f32 %v253, %v355
        %v389 = vadd.f32 %v254, %v358
        %v390 = vadd.f32 %v255, %v361
        %v391 = vadd.f32 %v256, %v364
        %v392 = vadd.f32 %v257, %v367
        %v393 = vadd.f32 %v258, %v370
        %v394 = vadd.f32 %v259, %v373
        %v395 = vadd.f32 %v260, %v376
        %v396 = vadd.f32 %v261, %v379
        %397 = vst [vmem:[#allocation2] sm:$0xff] %v381
        %398 = vst [vmem:[#allocation2 + $0x8] sm:$0xff] %v382
        %399 = vst [vmem:[#allocation2 + $0x10] sm:$0xff] %v383
        %400 = vst [vmem:[#allocation2 + $0x18] sm:$0xff] %v384
        %401 = vst [vmem:[#allocation2 + $0x20] sm:$0xff] %v385
        %402 = vst [vmem:[#allocation2 + $0x28] sm:$0xff] %v386
        %403 = vst [vmem:[#allocation2 + $0x30] sm:$0xff] %v387
        %404 = vst [vmem:[#allocation2 + $0x38] sm:$0xff] %v388
        %405 = vst [vmem:[#allocation2 + $0x40] sm:$0xff] %v389
        %406 = vst [vmem:[#allocation2 + $0x48] sm:$0xff] %v390
        %407 = vst [vmem:[#allocation2 + $0x50] sm:$0xff] %v391
        %408 = vst [vmem:[#allocation2 + $0x58] sm:$0xff] %v392
        %409 = vst [vmem:[#allocation2 + $0x60] sm:$0xff] %v393
        %410 = vst [vmem:[#allocation2 + $0x68] sm:$0xff] %v394
        %411 = vst [vmem:[#allocation2 + $0x70] sm:$0xff] %v395
        %412 = vst [vmem:[#allocation2 + $0x78] sm:$0xff] %v396
        %v413 = vld [vmem:[%s206 + $0x1] sm:$0xff]
        %v414 = vld [vmem:[%s206 + $0x9] sm:$0xff]
        %v415 = vld [vmem:[%s206 + $0x19] sm:$0xff]
        %v416 = vld [vmem:[%s206 + $0x21] sm:$0xff]
        %v417 = vld [vmem:[%s206 + $0x31] sm:$0xff]
        %v418 = vld [vmem:[%s206 + $0x39] sm:$0xff]
        %v419 = vld [vmem:[%s206 + $0x49] sm:$0xff]
        %v420 = vld [vmem:[%s206 + $0x51] sm:$0xff]
        %v421 = vld [vmem:[%s206 + $0x61] sm:$0xff]
        %v422 = vld [vmem:[%s206 + $0x69] sm:$0xff]
        %v423 = vld [vmem:[%s206 + $0x79] sm:$0xff]
        %v424 = vld [vmem:[%s206 + $0x81] sm:$0xff]
        %v425 = vld [vmem:[%s206 + $0x91] sm:$0xff]
        %v426 = vld [vmem:[%s206 + $0x99] sm:$0xff]
        %v427 = vld [vmem:[%s206 + $0xa9] sm:$0xff]
        %v428 = vld [vmem:[%s206 + $0xb1] sm:$0xff]
        %v429 = vld [vmem:[#allocation2] sm:$0xff]
        %v430 = vld [vmem:[#allocation2 + $0x8] sm:$0xff]
        %v431 = vld [vmem:[#allocation2 + $0x10] sm:$0xff]
        %v432 = vld [vmem:[#allocation2 + $0x18] sm:$0xff]
        %v433 = vld [vmem:[#allocation2 + $0x20] sm:$0xff]
        %v434 = vld [vmem:[#allocation2 + $0x28] sm:$0xff]
        %v435 = vld [vmem:[#allocation2 + $0x30] sm:$0xff]
        %v436 = vld [vmem:[#allocation2 + $0x38] sm:$0xff]
        %v437 = vld [vmem:[#allocation2 + $0x40] sm:$0xff]
        %v438 = vld [vmem:[#allocation2 + $0x48] sm:$0xff]
        %v439 = vld [vmem:[#allocation2 + $0x50] sm:$0xff]
        %v440 = vld [vmem:[#allocation2 + $0x58] sm:$0xff]
        %v441 = vld [vmem:[#allocation2 + $0x60] sm:$0xff]
        %v442 = vld [vmem:[#allocation2 + $0x68] sm:$0xff]
        %v443 = vld [vmem:[#allocation2 + $0x70] sm:$0xff]
        %v444 = vld [vmem:[#allocation2 + $0x78] sm:$0xff]
        %s445 = scalar_lea.vmem %s210, 4
        %v446 = vld [vmem:[%s445] sm:$0xf]
        %v448 = vsel %vm263, %v413, 0
        %v451 = vsel %vm263, %v414, 0
        %v454 = vsel %vm263, %v415, 0
        %v457 = vsel %vm263, %v416, 0
        %v460 = vsel %vm263, %v417, 0
        %v463 = vsel %vm263, %v418, 0
        %v466 = vsel %vm263, %v419, 0
        %v469 = vsel %vm263, %v420, 0
        %v472 = vsel %vm263, %v421, 0
        %v475 = vsel %vm263, %v422, 0
        %v478 = vsel %vm263, %v423, 0
        %v481 = vsel %vm263, %v424, 0
        %v484 = vsel %vm263, %v425, 0
        %v487 = vsel %vm263, %v426, 0
        %v490 = vsel %vm263, %v427, 0
        %v493 = vsel %vm263, %v428, 0
        %v496 = vsel %vm312, %v446, 0
        %498 = vmatpush.msra.mxu0 0.0
        %499 = vmatpush.msra.mxu0 0.0
        %500 = vmatpush.msra.mxu0 0.0
        %501 = vmatpush.msra.mxu0 0.0
        %502 = vmatpush.msra.mxu0 0.0
        %503 = vmatpush.msra.mxu0 0.0
        %504 = vmatpush.msra.mxu0 0.0
        %505 = vmatpush.msra.mxu0 0.0
        %506 = vmatpush.msra.mxu0 0.0
        %507 = vmatpush.msra.mxu0 0.0
        %508 = vmatpush.msra.mxu0 0.0
        %509 = vmatpush.msra.mxu0 0.0
        %510 = vmatpush.msra.mxu0 0.0
        %511 = vmatpush.msra.mxu0 0.0
        %512 = vmatpush.msra.mxu0 0.0
        %513 = vmatpush.msra.mxu0 %v496
        %514 = vmatmul.f32.gmra.mxu0 %v448
        %v515 = vpop.f32.mrf.mxu0
        %v516 = vadd.f32 0.0, %v515
        %517 = vmatmul.f32.gmra.mxu0 %v451
        %v518 = vpop.f32.mrf.mxu0
        %v519 = vadd.f32 0.0, %v518
        %520 = vmatmul.f32.gmra.mxu0 %v454
        %v521 = vpop.f32.mrf.mxu0
        %v522 = vadd.f32 0.0, %v521
        %523 = vmatmul.f32.gmra.mxu0 %v457
        %v524 = vpop.f32.mrf.mxu0
        %v525 = vadd.f32 0.0, %v524
        %526 = vmatmul.f32.gmra.mxu0 %v460
        %v527 = vpop.f32.mrf.mxu0
        %v528 = vadd.f32 0.0, %v527
        %529 = vmatmul.f32.gmra.mxu0 %v463
        %v530 = vpop.f32.mrf.mxu0
        %v531 = vadd.f32 0.0, %v530
        %532 = vmatmul.f32.gmra.mxu0 %v466
        %v533 = vpop.f32.mrf.mxu0
        %v534 = vadd.f32 0.0, %v533
        %535 = vmatmul.f32.gmra.mxu0 %v469
        %v536 = vpop.f32.mrf.mxu0
        %v537 = vadd.f32 0.0, %v536
        %538 = vmatmul.f32.gmra.mxu0 %v472
        %v539 = vpop.f32.mrf.mxu0
        %v540 = vadd.f32 0.0, %v539
        %541 = vmatmul.f32.gmra.mxu0 %v475
        %v542 = vpop.f32.mrf.mxu0
        %v543 = vadd.f32 0.0, %v542
        %544 = vmatmul.f32.gmra.mxu0 %v478
        %v545 = vpop.f32.mrf.mxu0
        %v546 = vadd.f32 0.0, %v545
        %547 = vmatmul.f32.gmra.mxu0 %v481
        %v548 = vpop.f32.mrf.mxu0
        %v549 = vadd.f32 0.0, %v548
        %550 = vmatmul.f32.gmra.mxu0 %v484
        %v551 = vpop.f32.mrf.mxu0
        %v552 = vadd.f32 0.0, %v551
        %553 = vmatmul.f32.gmra.mxu0 %v487
        %v554 = vpop.f32.mrf.mxu0
        %v555 = vadd.f32 0.0, %v554
        %556 = vmatmul.f32.gmra.mxu0 %v490
        %v557 = vpop.f32.mrf.mxu0
        %v558 = vadd.f32 0.0, %v557
        %559 = vmatmul.f32.gmra.mxu0 %v493
        %v560 = vpop.f32.mrf.mxu0
        %v561 = vadd.f32 0.0, %v560
        %562 = vdwg.mxu0
        %v563 = vadd.f32 %v429, %v516
        %v564 = vadd.f32 %v430, %v519
        %v565 = vadd.f32 %v431, %v522
        %v566 = vadd.f32 %v432, %v525
        %v567 = vadd.f32 %v433, %v528
        %v568 = vadd.f32 %v434, %v531
        %v569 = vadd.f32 %v435, %v534
        %v570 = vadd.f32 %v436, %v537
        %v571 = vadd.f32 %v437, %v540
        %v572 = vadd.f32 %v438, %v543
        %v573 = vadd.f32 %v439, %v546
        %v574 = vadd.f32 %v440, %v549
        %v575 = vadd.f32 %v441, %v552
        %v576 = vadd.f32 %v442, %v555
        %v577 = vadd.f32 %v443, %v558
        %v578 = vadd.f32 %v444, %v561
        %579 = vst [vmem:[#allocation2] sm:$0xff] %v563
        %580 = vst [vmem:[#allocation2 + $0x8] sm:$0xff] %v564
        %581 = vst [vmem:[#allocation2 + $0x10] sm:$0xff] %v565
        %582 = vst [vmem:[#allocation2 + $0x18] sm:$0xff] %v566
        %583 = vst [vmem:[#allocation2 + $0x20] sm:$0xff] %v567
        %584 = vst [vmem:[#allocation2 + $0x28] sm:$0xff] %v568
        %585 = vst [vmem:[#allocation2 + $0x30] sm:$0xff] %v569
        %586 = vst [vmem:[#allocation2 + $0x38] sm:$0xff] %v570
        %587 = vst [vmem:[#allocation2 + $0x40] sm:$0xff] %v571
        %588 = vst [vmem:[#allocation2 + $0x48] sm:$0xff] %v572
        %589 = vst [vmem:[#allocation2 + $0x50] sm:$0xff] %v573
        %590 = vst [vmem:[#allocation2 + $0x58] sm:$0xff] %v574
        %591 = vst [vmem:[#allocation2 + $0x60] sm:$0xff] %v575
        %592 = vst [vmem:[#allocation2 + $0x68] sm:$0xff] %v576
        %593 = vst [vmem:[#allocation2 + $0x70] sm:$0xff] %v577
        %594 = vst [vmem:[#allocation2 + $0x78] sm:$0xff] %v578
        %v595 = vld [vmem:[%s206 + $0x2] sm:$0xff]
        %v596 = vld [vmem:[%s206 + $0xa] sm:$0xff]
        %v597 = vld [vmem:[%s206 + $0x1a] sm:$0xff]
        %v598 = vld [vmem:[%s206 + $0x22] sm:$0xff]
        %v599 = vld [vmem:[%s206 + $0x32] sm:$0xff]
        %v600 = vld [vmem:[%s206 + $0x3a] sm:$0xff]
        %v601 = vld [vmem:[%s206 + $0x4a] sm:$0xff]
        %v602 = vld [vmem:[%s206 + $0x52] sm:$0xff]
        %v603 = vld [vmem:[%s206 + $0x62] sm:$0xff]
        %v604 = vld [vmem:[%s206 + $0x6a] sm:$0xff]
        %v605 = vld [vmem:[%s206 + $0x7a] sm:$0xff]
        %v606 = vld [vmem:[%s206 + $0x82] sm:$0xff]
        %v607 = vld [vmem:[%s206 + $0x92] sm:$0xff]
        %v608 = vld [vmem:[%s206 + $0x9a] sm:$0xff]
        %v609 = vld [vmem:[%s206 + $0xaa] sm:$0xff]
        %v610 = vld [vmem:[%s206 + $0xb2] sm:$0xff]
        %v611 = vld [vmem:[#allocation2] sm:$0xff]
        %v612 = vld [vmem:[#allocation2 + $0x8] sm:$0xff]
        %v613 = vld [vmem:[#allocation2 + $0x10] sm:$0xff]
        %v614 = vld [vmem:[#allocation2 + $0x18] sm:$0xff]
        %v615 = vld [vmem:[#allocation2 + $0x20] sm:$0xff]
        %v616 = vld [vmem:[#allocation2 + $0x28] sm:$0xff]
        %v617 = vld [vmem:[#allocation2 + $0x30] sm:$0xff]
        %v618 = vld [vmem:[#allocation2 + $0x38] sm:$0xff]
        %v619 = vld [vmem:[#allocation2 + $0x40] sm:$0xff]
        %v620 = vld [vmem:[#allocation2 + $0x48] sm:$0xff]
        %v621 = vld [vmem:[#allocation2 + $0x50] sm:$0xff]
        %v622 = vld [vmem:[#allocation2 + $0x58] sm:$0xff]
        %v623 = vld [vmem:[#allocation2 + $0x60] sm:$0xff]
        %v624 = vld [vmem:[#allocation2 + $0x68] sm:$0xff]
        %v625 = vld [vmem:[#allocation2 + $0x70] sm:$0xff]
        %v626 = vld [vmem:[#allocation2 + $0x78] sm:$0xff]
        %s627 = scalar_lea.vmem %s210, 8
        %v628 = vld [vmem:[%s627] sm:$0xf]
        %v630 = vsel %vm263, %v595, 0
        %v633 = vsel %vm263, %v596, 0
        %v636 = vsel %vm263, %v597, 0
        %v639 = vsel %vm263, %v598, 0
        %v642 = vsel %vm263, %v599, 0
        %v645 = vsel %vm263, %v600, 0
        %v648 = vsel %vm263, %v601, 0
        %v651 = vsel %vm263, %v602, 0
        %v654 = vsel %vm263, %v603, 0
        %v657 = vsel %vm263, %v604, 0
        %v660 = vsel %vm263, %v605, 0
        %v663 = vsel %vm263, %v606, 0
        %v666 = vsel %vm263, %v607, 0
        %v669 = vsel %vm263, %v608, 0
        %v672 = vsel %vm263, %v609, 0
        %v675 = vsel %vm263, %v610, 0
        %v678 = vsel %vm312, %v628, 0
        %680 = vmatpush.msra.mxu0 0.0
        %681 = vmatpush.msra.mxu0 0.0
        %682 = vmatpush.msra.mxu0 0.0
        %683 = vmatpush.msra.mxu0 0.0
        %684 = vmatpush.msra.mxu0 0.0
        %685 = vmatpush.msra.mxu0 0.0
        %686 = vmatpush.msra.mxu0 0.0
        %687 = vmatpush.msra.mxu0 0.0
        %688 = vmatpush.msra.mxu0 0.0
        %689 = vmatpush.msra.mxu0 0.0
        %690 = vmatpush.msra.mxu0 0.0
        %691 = vmatpush.msra.mxu0 0.0
        %692 = vmatpush.msra.mxu0 0.0
        %693 = vmatpush.msra.mxu0 0.0
        %694 = vmatpush.msra.mxu0 0.0
        %695 = vmatpush.msra.mxu0 %v678
        %696 = vmatmul.f32.gmra.mxu0 %v630
        %v697 = vpop.f32.mrf.mxu0
        %v698 = vadd.f32 0.0, %v697
        %699 = vmatmul.f32.gmra.mxu0 %v633
        %v700 = vpop.f32.mrf.mxu0
        %v701 = vadd.f32 0.0, %v700
        %702 = vmatmul.f32.gmra.mxu0 %v636
        %v703 = vpop.f32.mrf.mxu0
        %v704 = vadd.f32 0.0, %v703
        %705 = vmatmul.f32.gmra.mxu0 %v639
        %v706 = vpop.f32.mrf.mxu0
        %v707 = vadd.f32 0.0, %v706
        %708 = vmatmul.f32.gmra.mxu0 %v642
        %v709 = vpop.f32.mrf.mxu0
        %v710 = vadd.f32 0.0, %v709
        %711 = vmatmul.f32.gmra.mxu0 %v645
        %v712 = vpop.f32.mrf.mxu0
        %v713 = vadd.f32 0.0, %v712
        %714 = vmatmul.f32.gmra.mxu0 %v648
        %v715 = vpop.f32.mrf.mxu0
        %v716 = vadd.f32 0.0, %v715
        %717 = vmatmul.f32.gmra.mxu0 %v651
        %v718 = vpop.f32.mrf.mxu0
        %v719 = vadd.f32 0.0, %v718
        %720 = vmatmul.f32.gmra.mxu0 %v654
        %v721 = vpop.f32.mrf.mxu0
        %v722 = vadd.f32 0.0, %v721
        %723 = vmatmul.f32.gmra.mxu0 %v657
        %v724 = vpop.f32.mrf.mxu0
        %v725 = vadd.f32 0.0, %v724
        %726 = vmatmul.f32.gmra.mxu0 %v660
        %v727 = vpop.f32.mrf.mxu0
        %v728 = vadd.f32 0.0, %v727
        %729 = vmatmul.f32.gmra.mxu0 %v663
        %v730 = vpop.f32.mrf.mxu0
        %v731 = vadd.f32 0.0, %v730
        %732 = vmatmul.f32.gmra.mxu0 %v666
        %v733 = vpop.f32.mrf.mxu0
        %v734 = vadd.f32 0.0, %v733
        %735 = vmatmul.f32.gmra.mxu0 %v669
        %v736 = vpop.f32.mrf.mxu0
        %v737 = vadd.f32 0.0, %v736
        %738 = vmatmul.f32.gmra.mxu0 %v672
        %v739 = vpop.f32.mrf.mxu0
        %v740 = vadd.f32 0.0, %v739
        %741 = vmatmul.f32.gmra.mxu0 %v675
        %v742 = vpop.f32.mrf.mxu0
        %v743 = vadd.f32 0.0, %v742
        %744 = vdwg.mxu0
        %v745 = vadd.f32 %v611, %v698
        %v746 = vadd.f32 %v612, %v701
        %v747 = vadd.f32 %v613, %v704
        %v748 = vadd.f32 %v614, %v707
        %v749 = vadd.f32 %v615, %v710
        %v750 = vadd.f32 %v616, %v713
        %v751 = vadd.f32 %v617, %v716
        %v752 = vadd.f32 %v618, %v719
        %v753 = vadd.f32 %v619, %v722
        %v754 = vadd.f32 %v620, %v725
        %v755 = vadd.f32 %v621, %v728
        %v756 = vadd.f32 %v622, %v731
        %v757 = vadd.f32 %v623, %v734
        %v758 = vadd.f32 %v624, %v737
        %v759 = vadd.f32 %v625, %v740
        %v760 = vadd.f32 %v626, %v743
        %761 = vst [vmem:[#allocation2] sm:$0xff] %v745
        %762 = vst [vmem:[#allocation2 + $0x8] sm:$0xff] %v746
        %763 = vst [vmem:[#allocation2 + $0x10] sm:$0xff] %v747
        %764 = vst [vmem:[#allocation2 + $0x18] sm:$0xff] %v748
        %765 = vst [vmem:[#allocation2 + $0x20] sm:$0xff] %v749
        %766 = vst [vmem:[#allocation2 + $0x28] sm:$0xff] %v750
        %767 = vst [vmem:[#allocation2 + $0x30] sm:$0xff] %v751
        %768 = vst [vmem:[#allocation2 + $0x38] sm:$0xff] %v752
        %769 = vst [vmem:[#allocation2 + $0x40] sm:$0xff] %v753
        %770 = vst [vmem:[#allocation2 + $0x48] sm:$0xff] %v754
        %771 = vst [vmem:[#allocation2 + $0x50] sm:$0xff] %v755
        %772 = vst [vmem:[#allocation2 + $0x58] sm:$0xff] %v756
        %773 = vst [vmem:[#allocation2 + $0x60] sm:$0xff] %v757
        %774 = vst [vmem:[#allocation2 + $0x68] sm:$0xff] %v758
        %775 = vst [vmem:[#allocation2 + $0x70] sm:$0xff] %v759
        %776 = vst [vmem:[#allocation2 + $0x78] sm:$0xff] %v760
        %s777 = scalar_lea.vmem %s206, 24
        %v778 = vld [vmem:[%s777] sm:$0xff]
        %v779 = vld [vmem:[%s777 + $0x8] sm:$0xff]
        %v780 = vld [vmem:[%s777 + $0x18] sm:$0xff]
        %v781 = vld [vmem:[%s777 + $0x20] sm:$0xff]
        %v782 = vld [vmem:[%s777 + $0x30] sm:$0xff]
        %v783 = vld [vmem:[%s777 + $0x38] sm:$0xff]
        %v784 = vld [vmem:[%s777 + $0x48] sm:$0xff]
        %v785 = vld [vmem:[%s777 + $0x50] sm:$0xff]
        %v786 = vld [vmem:[%s777 + $0x60] sm:$0xff]
        %v787 = vld [vmem:[%s777 + $0x68] sm:$0xff]
        %v788 = vld [vmem:[%s777 + $0x78] sm:$0xff]
        %v789 = vld [vmem:[%s777 + $0x80] sm:$0xff]
        %v790 = vld [vmem:[%s777 + $0x90] sm:$0xff]
        %v791 = vld [vmem:[%s777 + $0x98] sm:$0xff]
        %v792 = vld [vmem:[%s777 + $0xa8] sm:$0xff]
        %v793 = vld [vmem:[%s777 + $0xb0] sm:$0xff]
        %v794 = vld [vmem:[#allocation2] sm:$0xff]
        %v795 = vld [vmem:[#allocation2 + $0x8] sm:$0xff]
        %v796 = vld [vmem:[#allocation2 + $0x10] sm:$0xff]
        %v797 = vld [vmem:[#allocation2 + $0x18] sm:$0xff]
        %v798 = vld [vmem:[#allocation2 + $0x20] sm:$0xff]
        %v799 = vld [vmem:[#allocation2 + $0x28] sm:$0xff]
        %v800 = vld [vmem:[#allocation2 + $0x30] sm:$0xff]
        %v801 = vld [vmem:[#allocation2 + $0x38] sm:$0xff]
        %v802 = vld [vmem:[#allocation2 + $0x40] sm:$0xff]
        %v803 = vld [vmem:[#allocation2 + $0x48] sm:$0xff]
        %v804 = vld [vmem:[#allocation2 + $0x50] sm:$0xff]
        %v805 = vld [vmem:[#allocation2 + $0x58] sm:$0xff]
        %v806 = vld [vmem:[#allocation2 + $0x60] sm:$0xff]
        %v807 = vld [vmem:[#allocation2 + $0x68] sm:$0xff]
        %v808 = vld [vmem:[#allocation2 + $0x70] sm:$0xff]
        %v809 = vld [vmem:[#allocation2 + $0x78] sm:$0xff]
        %s810 = scalar_lea.vmem %s210, 12
        %v811 = vld [vmem:[%s810] sm:$0xf]
        %v813 = vsel %vm263, %v778, 0
        %v816 = vsel %vm263, %v779, 0
        %v819 = vsel %vm263, %v780, 0
        %v822 = vsel %vm263, %v781, 0
        %v825 = vsel %vm263, %v782, 0
        %v828 = vsel %vm263, %v783, 0
        %v831 = vsel %vm263, %v784, 0
        %v834 = vsel %vm263, %v785, 0
        %v837 = vsel %vm263, %v786, 0
        %v840 = vsel %vm263, %v787, 0
        %v843 = vsel %vm263, %v788, 0
        %v846 = vsel %vm263, %v789, 0
        %v849 = vsel %vm263, %v790, 0
        %v852 = vsel %vm263, %v791, 0
        %v855 = vsel %vm263, %v792, 0
        %v858 = vsel %vm263, %v793, 0
        %v861 = vsel %vm312, %v811, 0
        %863 = vmatpush.msra.mxu0 0.0
        %864 = vmatpush.msra.mxu0 0.0
        %865 = vmatpush.msra.mxu0 0.0
        %866 = vmatpush.msra.mxu0 0.0
        %867 = vmatpush.msra.mxu0 0.0
        %868 = vmatpush.msra.mxu0 0.0
        %869 = vmatpush.msra.mxu0 0.0
        %870 = vmatpush.msra.mxu0 0.0
        %871 = vmatpush.msra.mxu0 0.0
        %872 = vmatpush.msra.mxu0 0.0
        %873 = vmatpush.msra.mxu0 0.0
        %874 = vmatpush.msra.mxu0 0.0
        %875 = vmatpush.msra.mxu0 0.0
        %876 = vmatpush.msra.mxu0 0.0
        %877 = vmatpush.msra.mxu0 0.0
        %878 = vmatpush.msra.mxu0 %v861
        %879 = vmatmul.f32.gmra.mxu0 %v813
        %v880 = vpop.f32.mrf.mxu0
        %v881 = vadd.f32 0.0, %v880
        %882 = vmatmul.f32.gmra.mxu0 %v816
        %v883 = vpop.f32.mrf.mxu0
        %v884 = vadd.f32 0.0, %v883
        %885 = vmatmul.f32.gmra.mxu0 %v819
        %v886 = vpop.f32.mrf.mxu0
        %v887 = vadd.f32 0.0, %v886
        %888 = vmatmul.f32.gmra.mxu0 %v822
        %v889 = vpop.f32.mrf.mxu0
        %v890 = vadd.f32 0.0, %v889
        %891 = vmatmul.f32.gmra.mxu0 %v825
        %v892 = vpop.f32.mrf.mxu0
        %v893 = vadd.f32 0.0, %v892
        %894 = vmatmul.f32.gmra.mxu0 %v828
        %v895 = vpop.f32.mrf.mxu0
        %v896 = vadd.f32 0.0, %v895
        %897 = vmatmul.f32.gmra.mxu0 %v831
        %v898 = vpop.f32.mrf.mxu0
        %v899 = vadd.f32 0.0, %v898
        %900 = vmatmul.f32.gmra.mxu0 %v834
        %v901 = vpop.f32.mrf.mxu0
        %v902 = vadd.f32 0.0, %v901
        %903 = vmatmul.f32.gmra.mxu0 %v837
        %v904 = vpop.f32.mrf.mxu0
        %v905 = vadd.f32 0.0, %v904
        %906 = vmatmul.f32.gmra.mxu0 %v840
        %v907 = vpop.f32.mrf.mxu0
        %v908 = vadd.f32 0.0, %v907
        %909 = vmatmul.f32.gmra.mxu0 %v843
        %v910 = vpop.f32.mrf.mxu0
        %v911 = vadd.f32 0.0, %v910
        %912 = vmatmul.f32.gmra.mxu0 %v846
        %v913 = vpop.f32.mrf.mxu0
        %v914 = vadd.f32 0.0, %v913
        %915 = vmatmul.f32.gmra.mxu0 %v849
        %v916 = vpop.f32.mrf.mxu0
        %v917 = vadd.f32 0.0, %v916
        %918 = vmatmul.f32.gmra.mxu0 %v852
        %v919 = vpop.f32.mrf.mxu0
        %v920 = vadd.f32 0.0, %v919
        %921 = vmatmul.f32.gmra.mxu0 %v855
        %v922 = vpop.f32.mrf.mxu0
        %v923 = vadd.f32 0.0, %v922
        %924 = vmatmul.f32.gmra.mxu0 %v858
        %v925 = vpop.f32.mrf.mxu0
        %v926 = vadd.f32 0.0, %v925
        %927 = vdwg.mxu0
        %v928 = vadd.f32 %v794, %v881
        %v929 = vadd.f32 %v795, %v884
        %v930 = vadd.f32 %v796, %v887
        %v931 = vadd.f32 %v797, %v890
        %v932 = vadd.f32 %v798, %v893
        %v933 = vadd.f32 %v799, %v896
        %v934 = vadd.f32 %v800, %v899
        %v935 = vadd.f32 %v801, %v902
        %v936 = vadd.f32 %v802, %v905
        %v937 = vadd.f32 %v803, %v908
        %v938 = vadd.f32 %v804, %v911
        %v939 = vadd.f32 %v805, %v914
        %v940 = vadd.f32 %v806, %v917
        %v941 = vadd.f32 %v807, %v920
        %v942 = vadd.f32 %v808, %v923
        %v943 = vadd.f32 %v809, %v926
        %944 = vst [vmem:[#allocation2] sm:$0xff] %v928
        %945 = vst [vmem:[#allocation2 + $0x8] sm:$0xff] %v929
        %946 = vst [vmem:[#allocation2 + $0x10] sm:$0xff] %v930
        %947 = vst [vmem:[#allocation2 + $0x18] sm:$0xff] %v931
        %948 = vst [vmem:[#allocation2 + $0x20] sm:$0xff] %v932
        %949 = vst [vmem:[#allocation2 + $0x28] sm:$0xff] %v933
        %950 = vst [vmem:[#allocation2 + $0x30] sm:$0xff] %v934
        %951 = vst [vmem:[#allocation2 + $0x38] sm:$0xff] %v935
        %952 = vst [vmem:[#allocation2 + $0x40] sm:$0xff] %v936
        %953 = vst [vmem:[#allocation2 + $0x48] sm:$0xff] %v937
        %954 = vst [vmem:[#allocation2 + $0x50] sm:$0xff] %v938
        %955 = vst [vmem:[#allocation2 + $0x58] sm:$0xff] %v939
        %956 = vst [vmem:[#allocation2 + $0x60] sm:$0xff] %v940
        %957 = vst [vmem:[#allocation2 + $0x68] sm:$0xff] %v941
        %958 = vst [vmem:[#allocation2 + $0x70] sm:$0xff] %v942
        %959 = vst [vmem:[#allocation2 + $0x78] sm:$0xff] %v943
        %v960 = vld [vmem:[%s777 + $0x1] sm:$0xff]
        %v961 = vld [vmem:[%s777 + $0x9] sm:$0xff]
        %v962 = vld [vmem:[%s777 + $0x19] sm:$0xff]
        %v963 = vld [vmem:[%s777 + $0x21] sm:$0xff]
        %v964 = vld [vmem:[%s777 + $0x31] sm:$0xff]
        %v965 = vld [vmem:[%s777 + $0x39] sm:$0xff]
        %v966 = vld [vmem:[%s777 + $0x49] sm:$0xff]
        %v967 = vld [vmem:[%s777 + $0x51] sm:$0xff]
        %v968 = vld [vmem:[%s777 + $0x61] sm:$0xff]
        %v969 = vld [vmem:[%s777 + $0x69] sm:$0xff]
        %v970 = vld [vmem:[%s777 + $0x79] sm:$0xff]
        %v971 = vld [vmem:[%s777 + $0x81] sm:$0xff]
        %v972 = vld [vmem:[%s777 + $0x91] sm:$0xff]
        %v973 = vld [vmem:[%s777 + $0x99] sm:$0xff]
        %v974 = vld [vmem:[%s777 + $0xa9] sm:$0xff]
        %v975 = vld [vmem:[%s777 + $0xb1] sm:$0xff]
        %v976 = vld [vmem:[#allocation2] sm:$0xff]
        %v977 = vld [vmem:[#allocation2 + $0x8] sm:$0xff]
        %v978 = vld [vmem:[#allocation2 + $0x10] sm:$0xff]
        %v979 = vld [vmem:[#allocation2 + $0x18] sm:$0xff]
        %v980 = vld [vmem:[#allocation2 + $0x20] sm:$0xff]
        %v981 = vld [vmem:[#allocation2 + $0x28] sm:$0xff]
        %v982 = vld [vmem:[#allocation2 + $0x30] sm:$0xff]
        %v983 = vld [vmem:[#allocation2 + $0x38] sm:$0xff]
        %v984 = vld [vmem:[#allocation2 + $0x40] sm:$0xff]
        %v985 = vld [vmem:[#allocation2 + $0x48] sm:$0xff]
        %v986 = vld [vmem:[#allocation2 + $0x50] sm:$0xff]
        %v987 = vld [vmem:[#allocation2 + $0x58] sm:$0xff]
        %v988 = vld [vmem:[#allocation2 + $0x60] sm:$0xff]
        %v989 = vld [vmem:[#allocation2 + $0x68] sm:$0xff]
        %v990 = vld [vmem:[#allocation2 + $0x70] sm:$0xff]
        %v991 = vld [vmem:[#allocation2 + $0x78] sm:$0xff]
        %s992 = scalar_lea.vmem %s210, 16
        %v993 = vld [vmem:[%s992] sm:$0xf]
        %v995 = vsel %vm263, %v960, 0
        %v998 = vsel %vm263, %v961, 0
        %v1001 = vsel %vm263, %v962, 0
        %v1004 = vsel %vm263, %v963, 0
        %v1007 = vsel %vm263, %v964, 0
        %v1010 = vsel %vm263, %v965, 0
        %v1013 = vsel %vm263, %v966, 0
        %v1016 = vsel %vm263, %v967, 0
        %v1019 = vsel %vm263, %v968, 0
        %v1022 = vsel %vm263, %v969, 0
        %v1025 = vsel %vm263, %v970, 0
        %v1028 = vsel %vm263, %v971, 0
        %v1031 = vsel %vm263, %v972, 0
        %v1034 = vsel %vm263, %v973, 0
        %v1037 = vsel %vm263, %v974, 0
        %v1040 = vsel %vm263, %v975, 0
        %v1043 = vsel %vm312, %v993, 0
        %1045 = vmatpush.msra.mxu0 0.0
        %1046 = vmatpush.msra.mxu0 0.0
        %1047 = vmatpush.msra.mxu0 0.0
        %1048 = vmatpush.msra.mxu0 0.0
        %1049 = vmatpush.msra.mxu0 0.0
        %1050 = vmatpush.msra.mxu0 0.0
        %1051 = vmatpush.msra.mxu0 0.0
        %1052 = vmatpush.msra.mxu0 0.0
        %1053 = vmatpush.msra.mxu0 0.0
        %1054 = vmatpush.msra.mxu0 0.0
        %1055 = vmatpush.msra.mxu0 0.0
        %1056 = vmatpush.msra.mxu0 0.0
        %1057 = vmatpush.msra.mxu0 0.0
        %1058 = vmatpush.msra.mxu0 0.0
        %1059 = vmatpush.msra.mxu0 0.0
        %1060 = vmatpush.msra.mxu0 %v1043
        %1061 = vmatmul.f32.gmra.mxu0 %v995
        %v1062 = vpop.f32.mrf.mxu0
        %v1063 = vadd.f32 0.0, %v1062
        %1064 = vmatmul.f32.gmra.mxu0 %v998
        %v1065 = vpop.f32.mrf.mxu0
        %v1066 = vadd.f32 0.0, %v1065
        %1067 = vmatmul.f32.gmra.mxu0 %v1001
        %v1068 = vpop.f32.mrf.mxu0
        %v1069 = vadd.f32 0.0, %v1068
        %1070 = vmatmul.f32.gmra.mxu0 %v1004
        %v1071 = vpop.f32.mrf.mxu0
        %v1072 = vadd.f32 0.0, %v1071
        %1073 = vmatmul.f32.gmra.mxu0 %v1007
        %v1074 = vpop.f32.mrf.mxu0
        %v1075 = vadd.f32 0.0, %v1074
        %1076 = vmatmul.f32.gmra.mxu0 %v1010
        %v1077 = vpop.f32.mrf.mxu0
        %v1078 = vadd.f32 0.0, %v1077
        %1079 = vmatmul.f32.gmra.mxu0 %v1013
        %v1080 = vpop.f32.mrf.mxu0
        %v1081 = vadd.f32 0.0, %v1080
        %1082 = vmatmul.f32.gmra.mxu0 %v1016
        %v1083 = vpop.f32.mrf.mxu0
        %v1084 = vadd.f32 0.0, %v1083
        %1085 = vmatmul.f32.gmra.mxu0 %v1019
        %v1086 = vpop.f32.mrf.mxu0
        %v1087 = vadd.f32 0.0, %v1086
        %1088 = vmatmul.f32.gmra.mxu0 %v1022
        %v1089 = vpop.f32.mrf.mxu0
        %v1090 = vadd.f32 0.0, %v1089
        %1091 = vmatmul.f32.gmra.mxu0 %v1025
        %v1092 = vpop.f32.mrf.mxu0
        %v1093 = vadd.f32 0.0, %v1092
        %1094 = vmatmul.f32.gmra.mxu0 %v1028
        %v1095 = vpop.f32.mrf.mxu0
        %v1096 = vadd.f32 0.0, %v1095
        %1097 = vmatmul.f32.gmra.mxu0 %v1031
        %v1098 = vpop.f32.mrf.mxu0
        %v1099 = vadd.f32 0.0, %v1098
        %1100 = vmatmul.f32.gmra.mxu0 %v1034
        %v1101 = vpop.f32.mrf.mxu0
        %v1102 = vadd.f32 0.0, %v1101
        %1103 = vmatmul.f32.gmra.mxu0 %v1037
        %v1104 = vpop.f32.mrf.mxu0
        %v1105 = vadd.f32 0.0, %v1104
        %1106 = vmatmul.f32.gmra.mxu0 %v1040
        %v1107 = vpop.f32.mrf.mxu0
        %v1108 = vadd.f32 0.0, %v1107
        %1109 = vdwg.mxu0
        %v1110 = vadd.f32 %v976, %v1063
        %v1111 = vadd.f32 %v977, %v1066
        %v1112 = vadd.f32 %v978, %v1069
        %v1113 = vadd.f32 %v979, %v1072
        %v1114 = vadd.f32 %v980, %v1075
        %v1115 = vadd.f32 %v981, %v1078
        %v1116 = vadd.f32 %v982, %v1081
        %v1117 = vadd.f32 %v983, %v1084
        %v1118 = vadd.f32 %v984, %v1087
        %v1119 = vadd.f32 %v985, %v1090
        %v1120 = vadd.f32 %v986, %v1093
        %v1121 = vadd.f32 %v987, %v1096
        %v1122 = vadd.f32 %v988, %v1099
        %v1123 = vadd.f32 %v989, %v1102
        %v1124 = vadd.f32 %v990, %v1105
        %v1125 = vadd.f32 %v991, %v1108
        %1126 = vst [vmem:[#allocation2] sm:$0xff] %v1110
        %1127 = vst [vmem:[#allocation2 + $0x8] sm:$0xff] %v1111
        %1128 = vst [vmem:[#allocation2 + $0x10] sm:$0xff] %v1112
        %1129 = vst [vmem:[#allocation2 + $0x18] sm:$0xff] %v1113
        %1130 = vst [vmem:[#allocation2 + $0x20] sm:$0xff] %v1114
        %1131 = vst [vmem:[#allocation2 + $0x28] sm:$0xff] %v1115
        %1132 = vst [vmem:[#allocation2 + $0x30] sm:$0xff] %v1116
        %1133 = vst [vmem:[#allocation2 + $0x38] sm:$0xff] %v1117
        %1134 = vst [vmem:[#allocation2 + $0x40] sm:$0xff] %v1118
        %1135 = vst [vmem:[#allocation2 + $0x48] sm:$0xff] %v1119
        %1136 = vst [vmem:[#allocation2 + $0x50] sm:$0xff] %v1120
        %1137 = vst [vmem:[#allocation2 + $0x58] sm:$0xff] %v1121
        %1138 = vst [vmem:[#allocation2 + $0x60] sm:$0xff] %v1122
        %1139 = vst [vmem:[#allocation2 + $0x68] sm:$0xff] %v1123
        %1140 = vst [vmem:[#allocation2 + $0x70] sm:$0xff] %v1124
        %1141 = vst [vmem:[#allocation2 + $0x78] sm:$0xff] %v1125
        %v1142 = vld [vmem:[%s777 + $0x2] sm:$0xff]
        %v1143 = vld [vmem:[%s777 + $0xa] sm:$0xff]
        %v1144 = vld [vmem:[%s777 + $0x1a] sm:$0xff]
        %v1145 = vld [vmem:[%s777 + $0x22] sm:$0xff]
        %v1146 = vld [vmem:[%s777 + $0x32] sm:$0xff]
        %v1147 = vld [vmem:[%s777 + $0x3a] sm:$0xff]
        %v1148 = vld [vmem:[%s777 + $0x4a] sm:$0xff]
        %v1149 = vld [vmem:[%s777 + $0x52] sm:$0xff]
        %v1150 = vld [vmem:[%s777 + $0x62] sm:$0xff]
        %v1151 = vld [vmem:[%s777 + $0x6a] sm:$0xff]
        %v1152 = vld [vmem:[%s777 + $0x7a] sm:$0xff]
        %v1153 = vld [vmem:[%s777 + $0x82] sm:$0xff]
        %v1154 = vld [vmem:[%s777 + $0x92] sm:$0xff]
        %v1155 = vld [vmem:[%s777 + $0x9a] sm:$0xff]
        %v1156 = vld [vmem:[%s777 + $0xaa] sm:$0xff]
        %v1157 = vld [vmem:[%s777 + $0xb2] sm:$0xff]
        %v1158 = vld [vmem:[#allocation2] sm:$0xff]
        %v1159 = vld [vmem:[#allocation2 + $0x8] sm:$0xff]
        %v1160 = vld [vmem:[#allocation2 + $0x10] sm:$0xff]
        %v1161 = vld [vmem:[#allocation2 + $0x18] sm:$0xff]
        %v1162 = vld [vmem:[#allocation2 + $0x20] sm:$0xff]
        %v1163 = vld [vmem:[#allocation2 + $0x28] sm:$0xff]
        %v1164 = vld [vmem:[#allocation2 + $0x30] sm:$0xff]
        %v1165 = vld [vmem:[#allocation2 + $0x38] sm:$0xff]
        %v1166 = vld [vmem:[#allocation2 + $0x40] sm:$0xff]
        %v1167 = vld [vmem:[#allocation2 + $0x48] sm:$0xff]
        %v1168 = vld [vmem:[#allocation2 + $0x50] sm:$0xff]
        %v1169 = vld [vmem:[#allocation2 + $0x58] sm:$0xff]
        %v1170 = vld [vmem:[#allocation2 + $0x60] sm:$0xff]
        %v1171 = vld [vmem:[#allocation2 + $0x68] sm:$0xff]
        %v1172 = vld [vmem:[#allocation2 + $0x70] sm:$0xff]
        %v1173 = vld [vmem:[#allocation2 + $0x78] sm:$0xff]
        %s1174 = scalar_lea.vmem %s210, 20
        %v1175 = vld [vmem:[%s1174] sm:$0xf]
        %v1177 = vsel %vm263, %v1142, 0
        %v1180 = vsel %vm263, %v1143, 0
        %v1183 = vsel %vm263, %v1144, 0
        %v1186 = vsel %vm263, %v1145, 0
        %v1189 = vsel %vm263, %v1146, 0
        %v1192 = vsel %vm263, %v1147, 0
        %v1195 = vsel %vm263, %v1148, 0
        %v1198 = vsel %vm263, %v1149, 0
        %v1201 = vsel %vm263, %v1150, 0
        %v1204 = vsel %vm263, %v1151, 0
        %v1207 = vsel %vm263, %v1152, 0
        %v1210 = vsel %vm263, %v1153, 0
        %v1213 = vsel %vm263, %v1154, 0
        %v1216 = vsel %vm263, %v1155, 0
        %v1219 = vsel %vm263, %v1156, 0
        %v1222 = vsel %vm263, %v1157, 0
        %v1225 = vsel %vm312, %v1175, 0
        %1227 = vmatpush.msra.mxu0 0.0
        %1228 = vmatpush.msra.mxu0 0.0
        %1229 = vmatpush.msra.mxu0 0.0
        %1230 = vmatpush.msra.mxu0 0.0
        %1231 = vmatpush.msra.mxu0 0.0
        %1232 = vmatpush.msra.mxu0 0.0
        %1233 = vmatpush.msra.mxu0 0.0
        %1234 = vmatpush.msra.mxu0 0.0
        %1235 = vmatpush.msra.mxu0 0.0
        %1236 = vmatpush.msra.mxu0 0.0
        %1237 = vmatpush.msra.mxu0 0.0
        %1238 = vmatpush.msra.mxu0 0.0
        %1239 = vmatpush.msra.mxu0 0.0
        %1240 = vmatpush.msra.mxu0 0.0
        %1241 = vmatpush.msra.mxu0 0.0
        %1242 = vmatpush.msra.mxu0 %v1225
        %1243 = vmatmul.f32.gmra.mxu0 %v1177
        %v1244 = vpop.f32.mrf.mxu0
        %v1245 = vadd.f32 0.0, %v1244
        %1246 = vmatmul.f32.gmra.mxu0 %v1180
        %v1247 = vpop.f32.mrf.mxu0
        %v1248 = vadd.f32 0.0, %v1247
        %1249 = vmatmul.f32.gmra.mxu0 %v1183
        %v1250 = vpop.f32.mrf.mxu0
        %v1251 = vadd.f32 0.0, %v1250
        %1252 = vmatmul.f32.gmra.mxu0 %v1186
        %v1253 = vpop.f32.mrf.mxu0
        %v1254 = vadd.f32 0.0, %v1253
        %1255 = vmatmul.f32.gmra.mxu0 %v1189
        %v1256 = vpop.f32.mrf.mxu0
        %v1257 = vadd.f32 0.0, %v1256
        %1258 = vmatmul.f32.gmra.mxu0 %v1192
        %v1259 = vpop.f32.mrf.mxu0
        %v1260 = vadd.f32 0.0, %v1259
        %1261 = vmatmul.f32.gmra.mxu0 %v1195
        %v1262 = vpop.f32.mrf.mxu0
        %v1263 = vadd.f32 0.0, %v1262
        %1264 = vmatmul.f32.gmra.mxu0 %v1198
        %v1265 = vpop.f32.mrf.mxu0
        %v1266 = vadd.f32 0.0, %v1265
        %1267 = vmatmul.f32.gmra.mxu0 %v1201
        %v1268 = vpop.f32.mrf.mxu0
        %v1269 = vadd.f32 0.0, %v1268
        %1270 = vmatmul.f32.gmra.mxu0 %v1204
        %v1271 = vpop.f32.mrf.mxu0
        %v1272 = vadd.f32 0.0, %v1271
        %1273 = vmatmul.f32.gmra.mxu0 %v1207
        %v1274 = vpop.f32.mrf.mxu0
        %v1275 = vadd.f32 0.0, %v1274
        %1276 = vmatmul.f32.gmra.mxu0 %v1210
        %v1277 = vpop.f32.mrf.mxu0
        %v1278 = vadd.f32 0.0, %v1277
        %1279 = vmatmul.f32.gmra.mxu0 %v1213
        %v1280 = vpop.f32.mrf.mxu0
        %v1281 = vadd.f32 0.0, %v1280
        %1282 = vmatmul.f32.gmra.mxu0 %v1216
        %v1283 = vpop.f32.mrf.mxu0
        %v1284 = vadd.f32 0.0, %v1283
        %1285 = vmatmul.f32.gmra.mxu0 %v1219
        %v1286 = vpop.f32.mrf.mxu0
        %v1287 = vadd.f32 0.0, %v1286
        %1288 = vmatmul.f32.gmra.mxu0 %v1222
        %v1289 = vpop.f32.mrf.mxu0
        %v1290 = vadd.f32 0.0, %v1289
        %1291 = vdwg.mxu0
        %v1292 = vadd.f32 %v1158, %v1245
        %v1293 = vadd.f32 %v1159, %v1248
        %v1294 = vadd.f32 %v1160, %v1251
        %v1295 = vadd.f32 %v1161, %v1254
        %v1296 = vadd.f32 %v1162, %v1257
        %v1297 = vadd.f32 %v1163, %v1260
        %v1298 = vadd.f32 %v1164, %v1263
        %v1299 = vadd.f32 %v1165, %v1266
        %v1300 = vadd.f32 %v1166, %v1269
        %v1301 = vadd.f32 %v1167, %v1272
        %v1302 = vadd.f32 %v1168, %v1275
        %v1303 = vadd.f32 %v1169, %v1278
        %v1304 = vadd.f32 %v1170, %v1281
        %v1305 = vadd.f32 %v1171, %v1284
        %v1306 = vadd.f32 %v1172, %v1287
        %v1307 = vadd.f32 %v1173, %v1290
        %1308 = vst [vmem:[#allocation2] sm:$0xff] %v1292
        %1309 = vst [vmem:[#allocation2 + $0x8] sm:$0xff] %v1293
        %1310 = vst [vmem:[#allocation2 + $0x10] sm:$0xff] %v1294
        %1311 = vst [vmem:[#allocation2 + $0x18] sm:$0xff] %v1295
        %1312 = vst [vmem:[#allocation2 + $0x20] sm:$0xff] %v1296
        %1313 = vst [vmem:[#allocation2 + $0x28] sm:$0xff] %v1297
        %1314 = vst [vmem:[#allocation2 + $0x30] sm:$0xff] %v1298
        %1315 = vst [vmem:[#allocation2 + $0x38] sm:$0xff] %v1299
        %1316 = vst [vmem:[#allocation2 + $0x40] sm:$0xff] %v1300
        %1317 = vst [vmem:[#allocation2 + $0x48] sm:$0xff] %v1301
        %1318 = vst [vmem:[#allocation2 + $0x50] sm:$0xff] %v1302
        %1319 = vst [vmem:[#allocation2 + $0x58] sm:$0xff] %v1303
        %1320 = vst [vmem:[#allocation2 + $0x60] sm:$0xff] %v1304
        %1321 = vst [vmem:[#allocation2 + $0x68] sm:$0xff] %v1305
        %1322 = vst [vmem:[#allocation2 + $0x70] sm:$0xff] %v1306
        %1323 = vst [vmem:[#allocation2 + $0x78] sm:$0xff] %v1307
        %s1324 = scalar_lea.vmem %s206, 48
        %v1325 = vld [vmem:[%s1324] sm:$0xff]
        %v1326 = vld [vmem:[%s1324 + $0x8] sm:$0xff]
        %v1327 = vld [vmem:[%s1324 + $0x18] sm:$0xff]
        %v1328 = vld [vmem:[%s1324 + $0x20] sm:$0xff]
        %v1329 = vld [vmem:[%s1324 + $0x30] sm:$0xff]
        %v1330 = vld [vmem:[%s1324 + $0x38] sm:$0xff]
        %v1331 = vld [vmem:[%s1324 + $0x48] sm:$0xff]
        %v1332 = vld [vmem:[%s1324 + $0x50] sm:$0xff]
        %v1333 = vld [vmem:[%s1324 + $0x60] sm:$0xff]
        %v1334 = vld [vmem:[%s1324 + $0x68] sm:$0xff]
        %v1335 = vld [vmem:[%s1324 + $0x78] sm:$0xff]
        %v1336 = vld [vmem:[%s1324 + $0x80] sm:$0xff]
        %v1337 = vld [vmem:[%s1324 + $0x90] sm:$0xff]
        %v1338 = vld [vmem:[%s1324 + $0x98] sm:$0xff]
        %v1339 = vld [vmem:[%s1324 + $0xa8] sm:$0xff]
        %v1340 = vld [vmem:[%s1324 + $0xb0] sm:$0xff]
        %v1341 = vld [vmem:[#allocation2] sm:$0xff]
        %v1342 = vld [vmem:[#allocation2 + $0x8] sm:$0xff]
        %v1343 = vld [vmem:[#allocation2 + $0x10] sm:$0xff]
        %v1344 = vld [vmem:[#allocation2 + $0x18] sm:$0xff]
        %v1345 = vld [vmem:[#allocation2 + $0x20] sm:$0xff]
        %v1346 = vld [vmem:[#allocation2 + $0x28] sm:$0xff]
        %v1347 = vld [vmem:[#allocation2 + $0x30] sm:$0xff]
        %v1348 = vld [vmem:[#allocation2 + $0x38] sm:$0xff]
        %v1349 = vld [vmem:[#allocation2 + $0x40] sm:$0xff]
        %v1350 = vld [vmem:[#allocation2 + $0x48] sm:$0xff]
        %v1351 = vld [vmem:[#allocation2 + $0x50] sm:$0xff]
        %v1352 = vld [vmem:[#allocation2 + $0x58] sm:$0xff]
        %v1353 = vld [vmem:[#allocation2 + $0x60] sm:$0xff]
        %v1354 = vld [vmem:[#allocation2 + $0x68] sm:$0xff]
        %v1355 = vld [vmem:[#allocation2 + $0x70] sm:$0xff]
        %v1356 = vld [vmem:[#allocation2 + $0x78] sm:$0xff]
        %s1357 = scalar_lea.vmem %s210, 24
        %v1358 = vld [vmem:[%s1357] sm:$0xf]
        %v1360 = vsel %vm263, %v1325, 0
        %v1363 = vsel %vm263, %v1326, 0
        %v1366 = vsel %vm263, %v1327, 0
        %v1369 = vsel %vm263, %v1328, 0
        %v1372 = vsel %vm263, %v1329, 0
        %v1375 = vsel %vm263, %v1330, 0
        %v1378 = vsel %vm263, %v1331, 0
        %v1381 = vsel %vm263, %v1332, 0
        %v1384 = vsel %vm263, %v1333, 0
        %v1387 = vsel %vm263, %v1334, 0
        %v1390 = vsel %vm263, %v1335, 0
        %v1393 = vsel %vm263, %v1336, 0
        %v1396 = vsel %vm263, %v1337, 0
        %v1399 = vsel %vm263, %v1338, 0
        %v1402 = vsel %vm263, %v1339, 0
        %v1405 = vsel %vm263, %v1340, 0
        %v1408 = vsel %vm312, %v1358, 0
        %1410 = vmatpush.msra.mxu0 0.0
        %1411 = vmatpush.msra.mxu0 0.0
        %1412 = vmatpush.msra.mxu0 0.0
        %1413 = vmatpush.msra.mxu0 0.0
        %1414 = vmatpush.msra.mxu0 0.0
        %1415 = vmatpush.msra.mxu0 0.0
        %1416 = vmatpush.msra.mxu0 0.0
        %1417 = vmatpush.msra.mxu0 0.0
        %1418 = vmatpush.msra.mxu0 0.0
        %1419 = vmatpush.msra.mxu0 0.0
        %1420 = vmatpush.msra.mxu0 0.0
        %1421 = vmatpush.msra.mxu0 0.0
        %1422 = vmatpush.msra.mxu0 0.0
        %1423 = vmatpush.msra.mxu0 0.0
        %1424 = vmatpush.msra.mxu0 0.0
        %1425 = vmatpush.msra.mxu0 %v1408
        %1426 = vmatmul.f32.gmra.mxu0 %v1360
        %v1427 = vpop.f32.mrf.mxu0
        %v1428 = vadd.f32 0.0, %v1427
        %1429 = vmatmul.f32.gmra.mxu0 %v1363
        %v1430 = vpop.f32.mrf.mxu0
        %v1431 = vadd.f32 0.0, %v1430
        %1432 = vmatmul.f32.gmra.mxu0 %v1366
        %v1433 = vpop.f32.mrf.mxu0
        %v1434 = vadd.f32 0.0, %v1433
        %1435 = vmatmul.f32.gmra.mxu0 %v1369
        %v1436 = vpop.f32.mrf.mxu0
        %v1437 = vadd.f32 0.0, %v1436
        %1438 = vmatmul.f32.gmra.mxu0 %v1372
        %v1439 = vpop.f32.mrf.mxu0
        %v1440 = vadd.f32 0.0, %v1439
        %1441 = vmatmul.f32.gmra.mxu0 %v1375
        %v1442 = vpop.f32.mrf.mxu0
        %v1443 = vadd.f32 0.0, %v1442
        %1444 = vmatmul.f32.gmra.mxu0 %v1378
        %v1445 = vpop.f32.mrf.mxu0
        %v1446 = vadd.f32 0.0, %v1445
        %1447 = vmatmul.f32.gmra.mxu0 %v1381
        %v1448 = vpop.f32.mrf.mxu0
        %v1449 = vadd.f32 0.0, %v1448
        %1450 = vmatmul.f32.gmra.mxu0 %v1384
        %v1451 = vpop.f32.mrf.mxu0
        %v1452 = vadd.f32 0.0, %v1451
        %1453 = vmatmul.f32.gmra.mxu0 %v1387
        %v1454 = vpop.f32.mrf.mxu0
        %v1455 = vadd.f32 0.0, %v1454
        %1456 = vmatmul.f32.gmra.mxu0 %v1390
        %v1457 = vpop.f32.mrf.mxu0
        %v1458 = vadd.f32 0.0, %v1457
        %1459 = vmatmul.f32.gmra.mxu0 %v1393
        %v1460 = vpop.f32.mrf.mxu0
        %v1461 = vadd.f32 0.0, %v1460
        %1462 = vmatmul.f32.gmra.mxu0 %v1396
        %v1463 = vpop.f32.mrf.mxu0
        %v1464 = vadd.f32 0.0, %v1463
        %1465 = vmatmul.f32.gmra.mxu0 %v1399
        %v1466 = vpop.f32.mrf.mxu0
        %v1467 = vadd.f32 0.0, %v1466
        %1468 = vmatmul.f32.gmra.mxu0 %v1402
        %v1469 = vpop.f32.mrf.mxu0
        %v1470 = vadd.f32 0.0, %v1469
        %1471 = vmatmul.f32.gmra.mxu0 %v1405
        %v1472 = vpop.f32.mrf.mxu0
        %v1473 = vadd.f32 0.0, %v1472
        %1474 = vdwg.mxu0
        %v1475 = vadd.f32 %v1341, %v1428
        %v1476 = vadd.f32 %v1342, %v1431
        %v1477 = vadd.f32 %v1343, %v1434
        %v1478 = vadd.f32 %v1344, %v1437
        %v1479 = vadd.f32 %v1345, %v1440
        %v1480 = vadd.f32 %v1346, %v1443
        %v1481 = vadd.f32 %v1347, %v1446
        %v1482 = vadd.f32 %v1348, %v1449
        %v1483 = vadd.f32 %v1349, %v1452
        %v1484 = vadd.f32 %v1350, %v1455
        %v1485 = vadd.f32 %v1351, %v1458
        %v1486 = vadd.f32 %v1352, %v1461
        %v1487 = vadd.f32 %v1353, %v1464
        %v1488 = vadd.f32 %v1354, %v1467
        %v1489 = vadd.f32 %v1355, %v1470
        %v1490 = vadd.f32 %v1356, %v1473
        %1491 = vst [vmem:[#allocation2] sm:$0xff] %v1475
        %1492 = vst [vmem:[#allocation2 + $0x8] sm:$0xff] %v1476
        %1493 = vst [vmem:[#allocation2 + $0x10] sm:$0xff] %v1477
        %1494 = vst [vmem:[#allocation2 + $0x18] sm:$0xff] %v1478
        %1495 = vst [vmem:[#allocation2 + $0x20] sm:$0xff] %v1479
        %1496 = vst [vmem:[#allocation2 + $0x28] sm:$0xff] %v1480
        %1497 = vst [vmem:[#allocation2 + $0x30] sm:$0xff] %v1481
        %1498 = vst [vmem:[#allocation2 + $0x38] sm:$0xff] %v1482
        %1499 = vst [vmem:[#allocation2 + $0x40] sm:$0xff] %v1483
        %1500 = vst [vmem:[#allocation2 + $0x48] sm:$0xff] %v1484
        %1501 = vst [vmem:[#allocation2 + $0x50] sm:$0xff] %v1485
        %1502 = vst [vmem:[#allocation2 + $0x58] sm:$0xff] %v1486
        %1503 = vst [vmem:[#allocation2 + $0x60] sm:$0xff] %v1487
        %1504 = vst [vmem:[#allocation2 + $0x68] sm:$0xff] %v1488
        %1505 = vst [vmem:[#allocation2 + $0x70] sm:$0xff] %v1489
        %1506 = vst [vmem:[#allocation2 + $0x78] sm:$0xff] %v1490
        %v1507 = vld [vmem:[%s1324 + $0x1] sm:$0xff]
        %v1508 = vld [vmem:[%s1324 + $0x9] sm:$0xff]
        %v1509 = vld [vmem:[%s1324 + $0x19] sm:$0xff]
        %v1510 = vld [vmem:[%s1324 + $0x21] sm:$0xff]
        %v1511 = vld [vmem:[%s1324 + $0x31] sm:$0xff]
        %v1512 = vld [vmem:[%s1324 + $0x39] sm:$0xff]
        %v1513 = vld [vmem:[%s1324 + $0x49] sm:$0xff]
        %v1514 = vld [vmem:[%s1324 + $0x51] sm:$0xff]
        %v1515 = vld [vmem:[%s1324 + $0x61] sm:$0xff]
        %v1516 = vld [vmem:[%s1324 + $0x69] sm:$0xff]
        %v1517 = vld [vmem:[%s1324 + $0x79] sm:$0xff]
        %v1518 = vld [vmem:[%s1324 + $0x81] sm:$0xff]
        %v1519 = vld [vmem:[%s1324 + $0x91] sm:$0xff]
        %v1520 = vld [vmem:[%s1324 + $0x99] sm:$0xff]
        %v1521 = vld [vmem:[%s1324 + $0xa9] sm:$0xff]
        %v1522 = vld [vmem:[%s1324 + $0xb1] sm:$0xff]
        %v1523 = vld [vmem:[#allocation2] sm:$0xff]
        %v1524 = vld [vmem:[#allocation2 + $0x8] sm:$0xff]
        %v1525 = vld [vmem:[#allocation2 + $0x10] sm:$0xff]
        %v1526 = vld [vmem:[#allocation2 + $0x18] sm:$0xff]
        %v1527 = vld [vmem:[#allocation2 + $0x20] sm:$0xff]
        %v1528 = vld [vmem:[#allocation2 + $0x28] sm:$0xff]
        %v1529 = vld [vmem:[#allocation2 + $0x30] sm:$0xff]
        %v1530 = vld [vmem:[#allocation2 + $0x38] sm:$0xff]
        %v1531 = vld [vmem:[#allocation2 + $0x40] sm:$0xff]
        %v1532 = vld [vmem:[#allocation2 + $0x48] sm:$0xff]
        %v1533 = vld [vmem:[#allocation2 + $0x50] sm:$0xff]
        %v1534 = vld [vmem:[#allocation2 + $0x58] sm:$0xff]
        %v1535 = vld [vmem:[#allocation2 + $0x60] sm:$0xff]
        %v1536 = vld [vmem:[#allocation2 + $0x68] sm:$0xff]
        %v1537 = vld [vmem:[#allocation2 + $0x70] sm:$0xff]
        %v1538 = vld [vmem:[#allocation2 + $0x78] sm:$0xff]
        %s1539 = scalar_lea.vmem %s210, 28
        %v1540 = vld [vmem:[%s1539] sm:$0xf]
        %v1542 = vsel %vm263, %v1507, 0
        %v1545 = vsel %vm263, %v1508, 0
        %v1548 = vsel %vm263, %v1509, 0
        %v1551 = vsel %vm263, %v1510, 0
        %v1554 = vsel %vm263, %v1511, 0
        %v1557 = vsel %vm263, %v1512, 0
        %v1560 = vsel %vm263, %v1513, 0
        %v1563 = vsel %vm263, %v1514, 0
        %v1566 = vsel %vm263, %v1515, 0
        %v1569 = vsel %vm263, %v1516, 0
        %v1572 = vsel %vm263, %v1517, 0
        %v1575 = vsel %vm263, %v1518, 0
        %v1578 = vsel %vm263, %v1519, 0
        %v1581 = vsel %vm263, %v1520, 0
        %v1584 = vsel %vm263, %v1521, 0
        %v1587 = vsel %vm263, %v1522, 0
        %v1590 = vsel %vm312, %v1540, 0
        %1592 = vmatpush.msra.mxu0 0.0
        %1593 = vmatpush.msra.mxu0 0.0
        %1594 = vmatpush.msra.mxu0 0.0
        %1595 = vmatpush.msra.mxu0 0.0
        %1596 = vmatpush.msra.mxu0 0.0
        %1597 = vmatpush.msra.mxu0 0.0
        %1598 = vmatpush.msra.mxu0 0.0
        %1599 = vmatpush.msra.mxu0 0.0
        %1600 = vmatpush.msra.mxu0 0.0
        %1601 = vmatpush.msra.mxu0 0.0
        %1602 = vmatpush.msra.mxu0 0.0
        %1603 = vmatpush.msra.mxu0 0.0
        %1604 = vmatpush.msra.mxu0 0.0
        %1605 = vmatpush.msra.mxu0 0.0
        %1606 = vmatpush.msra.mxu0 0.0
        %1607 = vmatpush.msra.mxu0 %v1590
        %1608 = vmatmul.f32.gmra.mxu0 %v1542
        %v1609 = vpop.f32.mrf.mxu0
        %v1610 = vadd.f32 0.0, %v1609
        %1611 = vmatmul.f32.gmra.mxu0 %v1545
        %v1612 = vpop.f32.mrf.mxu0
        %v1613 = vadd.f32 0.0, %v1612
        %1614 = vmatmul.f32.gmra.mxu0 %v1548
        %v1615 = vpop.f32.mrf.mxu0
        %v1616 = vadd.f32 0.0, %v1615
        %1617 = vmatmul.f32.gmra.mxu0 %v1551
        %v1618 = vpop.f32.mrf.mxu0
        %v1619 = vadd.f32 0.0, %v1618
        %1620 = vmatmul.f32.gmra.mxu0 %v1554
        %v1621 = vpop.f32.mrf.mxu0
        %v1622 = vadd.f32 0.0, %v1621
        %1623 = vmatmul.f32.gmra.mxu0 %v1557
        %v1624 = vpop.f32.mrf.mxu0
        %v1625 = vadd.f32 0.0, %v1624
        %1626 = vmatmul.f32.gmra.mxu0 %v1560
        %v1627 = vpop.f32.mrf.mxu0
        %v1628 = vadd.f32 0.0, %v1627
        %1629 = vmatmul.f32.gmra.mxu0 %v1563
        %v1630 = vpop.f32.mrf.mxu0
        %v1631 = vadd.f32 0.0, %v1630
        %1632 = vmatmul.f32.gmra.mxu0 %v1566
        %v1633 = vpop.f32.mrf.mxu0
        %v1634 = vadd.f32 0.0, %v1633
        %1635 = vmatmul.f32.gmra.mxu0 %v1569
        %v1636 = vpop.f32.mrf.mxu0
        %v1637 = vadd.f32 0.0, %v1636
        %1638 = vmatmul.f32.gmra.mxu0 %v1572
        %v1639 = vpop.f32.mrf.mxu0
        %v1640 = vadd.f32 0.0, %v1639
        %1641 = vmatmul.f32.gmra.mxu0 %v1575
        %v1642 = vpop.f32.mrf.mxu0
        %v1643 = vadd.f32 0.0, %v1642
        %1644 = vmatmul.f32.gmra.mxu0 %v1578
        %v1645 = vpop.f32.mrf.mxu0
        %v1646 = vadd.f32 0.0, %v1645
        %1647 = vmatmul.f32.gmra.mxu0 %v1581
        %v1648 = vpop.f32.mrf.mxu0
        %v1649 = vadd.f32 0.0, %v1648
        %1650 = vmatmul.f32.gmra.mxu0 %v1584
        %v1651 = vpop.f32.mrf.mxu0
        %v1652 = vadd.f32 0.0, %v1651
        %1653 = vmatmul.f32.gmra.mxu0 %v1587
        %v1654 = vpop.f32.mrf.mxu0
        %v1655 = vadd.f32 0.0, %v1654
        %1656 = vdwg.mxu0
        %v1657 = vadd.f32 %v1523, %v1610
        %v1658 = vadd.f32 %v1524, %v1613
        %v1659 = vadd.f32 %v1525, %v1616
        %v1660 = vadd.f32 %v1526, %v1619
        %v1661 = vadd.f32 %v1527, %v1622
        %v1662 = vadd.f32 %v1528, %v1625
        %v1663 = vadd.f32 %v1529, %v1628
        %v1664 = vadd.f32 %v1530, %v1631
        %v1665 = vadd.f32 %v1531, %v1634
        %v1666 = vadd.f32 %v1532, %v1637
        %v1667 = vadd.f32 %v1533, %v1640
        %v1668 = vadd.f32 %v1534, %v1643
        %v1669 = vadd.f32 %v1535, %v1646
        %v1670 = vadd.f32 %v1536, %v1649
        %v1671 = vadd.f32 %v1537, %v1652
        %v1672 = vadd.f32 %v1538, %v1655
        %1673 = vst [vmem:[#allocation2] sm:$0xff] %v1657
        %1674 = vst [vmem:[#allocation2 + $0x8] sm:$0xff] %v1658
        %1675 = vst [vmem:[#allocation2 + $0x10] sm:$0xff] %v1659
        %1676 = vst [vmem:[#allocation2 + $0x18] sm:$0xff] %v1660
        %1677 = vst [vmem:[#allocation2 + $0x20] sm:$0xff] %v1661
        %1678 = vst [vmem:[#allocation2 + $0x28] sm:$0xff] %v1662
        %1679 = vst [vmem:[#allocation2 + $0x30] sm:$0xff] %v1663
        %1680 = vst [vmem:[#allocation2 + $0x38] sm:$0xff] %v1664
        %1681 = vst [vmem:[#allocation2 + $0x40] sm:$0xff] %v1665
        %1682 = vst [vmem:[#allocation2 + $0x48] sm:$0xff] %v1666
        %1683 = vst [vmem:[#allocation2 + $0x50] sm:$0xff] %v1667
        %1684 = vst [vmem:[#allocation2 + $0x58] sm:$0xff] %v1668
        %1685 = vst [vmem:[#allocation2 + $0x60] sm:$0xff] %v1669
        %1686 = vst [vmem:[#allocation2 + $0x68] sm:$0xff] %v1670
        %1687 = vst [vmem:[#allocation2 + $0x70] sm:$0xff] %v1671
        %1688 = vst [vmem:[#allocation2 + $0x78] sm:$0xff] %v1672
        %v1689 = vld [vmem:[%s1324 + $0x2] sm:$0xff]
        %v1690 = vld [vmem:[%s1324 + $0xa] sm:$0xff]
        %v1691 = vld [vmem:[%s1324 + $0x1a] sm:$0xff]
        %v1692 = vld [vmem:[%s1324 + $0x22] sm:$0xff]
        %v1693 = vld [vmem:[%s1324 + $0x32] sm:$0xff]
        %v1694 = vld [vmem:[%s1324 + $0x3a] sm:$0xff]
        %v1695 = vld [vmem:[%s1324 + $0x4a] sm:$0xff]
        %v1696 = vld [vmem:[%s1324 + $0x52] sm:$0xff]
        %v1697 = vld [vmem:[%s1324 + $0x62] sm:$0xff]
        %v1698 = vld [vmem:[%s1324 + $0x6a] sm:$0xff]
        %v1699 = vld [vmem:[%s1324 + $0x7a] sm:$0xff]
        %v1700 = vld [vmem:[%s1324 + $0x82] sm:$0xff]
        %v1701 = vld [vmem:[%s1324 + $0x92] sm:$0xff]
        %v1702 = vld [vmem:[%s1324 + $0x9a] sm:$0xff]
        %v1703 = vld [vmem:[%s1324 + $0xaa] sm:$0xff]
        %v1704 = vld [vmem:[%s1324 + $0xb2] sm:$0xff]
        %v1705 = vld [vmem:[#allocation2] sm:$0xff]
        %v1706 = vld [vmem:[#allocation2 + $0x8] sm:$0xff]
        %v1707 = vld [vmem:[#allocation2 + $0x10] sm:$0xff]
        %v1708 = vld [vmem:[#allocation2 + $0x18] sm:$0xff]
        %v1709 = vld [vmem:[#allocation2 + $0x20] sm:$0xff]
        %v1710 = vld [vmem:[#allocation2 + $0x28] sm:$0xff]
        %v1711 = vld [vmem:[#allocation2 + $0x30] sm:$0xff]
        %v1712 = vld [vmem:[#allocation2 + $0x38] sm:$0xff]
        %v1713 = vld [vmem:[#allocation2 + $0x40] sm:$0xff]
        %v1714 = vld [vmem:[#allocation2 + $0x48] sm:$0xff]
        %v1715 = vld [vmem:[#allocation2 + $0x50] sm:$0xff]
        %v1716 = vld [vmem:[#allocation2 + $0x58] sm:$0xff]
        %v1717 = vld [vmem:[#allocation2 + $0x60] sm:$0xff]
        %v1718 = vld [vmem:[#allocation2 + $0x68] sm:$0xff]
        %v1719 = vld [vmem:[#allocation2 + $0x70] sm:$0xff]
        %v1720 = vld [vmem:[#allocation2 + $0x78] sm:$0xff]
        %s1721 = scalar_lea.vmem %s210, 32
        %v1722 = vld [vmem:[%s1721] sm:$0xf]
        %v1724 = vsel %vm263, %v1689, 0
        %v1727 = vsel %vm263, %v1690, 0
        %v1730 = vsel %vm263, %v1691, 0
        %v1733 = vsel %vm263, %v1692, 0
        %v1736 = vsel %vm263, %v1693, 0
        %v1739 = vsel %vm263, %v1694, 0
        %v1742 = vsel %vm263, %v1695, 0
        %v1745 = vsel %vm263, %v1696, 0
        %v1748 = vsel %vm263, %v1697, 0
        %v1751 = vsel %vm263, %v1698, 0
        %v1754 = vsel %vm263, %v1699, 0
        %v1757 = vsel %vm263, %v1700, 0
        %v1760 = vsel %vm263, %v1701, 0
        %v1763 = vsel %vm263, %v1702, 0
        %v1766 = vsel %vm263, %v1703, 0
        %v1769 = vsel %vm263, %v1704, 0
        %v1772 = vsel %vm312, %v1722, 0
        %1774 = vmatpush.msra.mxu0 0.0
        %1775 = vmatpush.msra.mxu0 0.0
        %1776 = vmatpush.msra.mxu0 0.0
        %1777 = vmatpush.msra.mxu0 0.0
        %1778 = vmatpush.msra.mxu0 0.0
        %1779 = vmatpush.msra.mxu0 0.0
        %1780 = vmatpush.msra.mxu0 0.0
        %1781 = vmatpush.msra.mxu0 0.0
        %1782 = vmatpush.msra.mxu0 0.0
        %1783 = vmatpush.msra.mxu0 0.0
        %1784 = vmatpush.msra.mxu0 0.0
        %1785 = vmatpush.msra.mxu0 0.0
        %1786 = vmatpush.msra.mxu0 0.0
        %1787 = vmatpush.msra.mxu0 0.0
        %1788 = vmatpush.msra.mxu0 0.0
        %1789 = vmatpush.msra.mxu0 %v1772
        %1790 = vmatmul.f32.gmra.mxu0 %v1724
        %v1791 = vpop.f32.mrf.mxu0
        %v1792 = vadd.f32 0.0, %v1791
        %1793 = vmatmul.f32.gmra.mxu0 %v1727
        %v1794 = vpop.f32.mrf.mxu0
        %v1795 = vadd.f32 0.0, %v1794
        %1796 = vmatmul.f32.gmra.mxu0 %v1730
        %v1797 = vpop.f32.mrf.mxu0
        %v1798 = vadd.f32 0.0, %v1797
        %1799 = vmatmul.f32.gmra.mxu0 %v1733
        %v1800 = vpop.f32.mrf.mxu0
        %v1801 = vadd.f32 0.0, %v1800
        %1802 = vmatmul.f32.gmra.mxu0 %v1736
        %v1803 = vpop.f32.mrf.mxu0
        %v1804 = vadd.f32 0.0, %v1803
        %1805 = vmatmul.f32.gmra.mxu0 %v1739
        %v1806 = vpop.f32.mrf.mxu0
        %v1807 = vadd.f32 0.0, %v1806
        %1808 = vmatmul.f32.gmra.mxu0 %v1742
        %v1809 = vpop.f32.mrf.mxu0
        %v1810 = vadd.f32 0.0, %v1809
        %1811 = vmatmul.f32.gmra.mxu0 %v1745
        %v1812 = vpop.f32.mrf.mxu0
        %v1813 = vadd.f32 0.0, %v1812
        %1814 = vmatmul.f32.gmra.mxu0 %v1748
        %v1815 = vpop.f32.mrf.mxu0
        %v1816 = vadd.f32 0.0, %v1815
        %1817 = vmatmul.f32.gmra.mxu0 %v1751
        %v1818 = vpop.f32.mrf.mxu0
        %v1819 = vadd.f32 0.0, %v1818
        %1820 = vmatmul.f32.gmra.mxu0 %v1754
        %v1821 = vpop.f32.mrf.mxu0
        %v1822 = vadd.f32 0.0, %v1821
        %1823 = vmatmul.f32.gmra.mxu0 %v1757
        %v1824 = vpop.f32.mrf.mxu0
        %v1825 = vadd.f32 0.0, %v1824
        %1826 = vmatmul.f32.gmra.mxu0 %v1760
        %v1827 = vpop.f32.mrf.mxu0
        %v1828 = vadd.f32 0.0, %v1827
        %1829 = vmatmul.f32.gmra.mxu0 %v1763
        %v1830 = vpop.f32.mrf.mxu0
        %v1831 = vadd.f32 0.0, %v1830
        %1832 = vmatmul.f32.gmra.mxu0 %v1766
        %v1833 = vpop.f32.mrf.mxu0
        %v1834 = vadd.f32 0.0, %v1833
        %1835 = vmatmul.f32.gmra.mxu0 %v1769
        %v1836 = vpop.f32.mrf.mxu0
        %v1837 = vadd.f32 0.0, %v1836
        %1838 = vdwg.mxu0
        %v1839 = vadd.f32 %v1705, %v1792
        %v1840 = vadd.f32 %v1706, %v1795
        %v1841 = vadd.f32 %v1707, %v1798
        %v1842 = vadd.f32 %v1708, %v1801
        %v1843 = vadd.f32 %v1709, %v1804
        %v1844 = vadd.f32 %v1710, %v1807
        %v1845 = vadd.f32 %v1711, %v1810
        %v1846 = vadd.f32 %v1712, %v1813
        %v1847 = vadd.f32 %v1713, %v1816
        %v1848 = vadd.f32 %v1714, %v1819
        %v1849 = vadd.f32 %v1715, %v1822
        %v1850 = vadd.f32 %v1716, %v1825
        %v1851 = vadd.f32 %v1717, %v1828
        %v1852 = vadd.f32 %v1718, %v1831
        %v1853 = vadd.f32 %v1719, %v1834
        %v1854 = vadd.f32 %v1720, %v1837
        %1855 = vst [vmem:[#allocation2] sm:$0xff] %v1839
        %1856 = vst [vmem:[#allocation2 + $0x8] sm:$0xff] %v1840
        %1857 = vst [vmem:[#allocation2 + $0x10] sm:$0xff] %v1841
        %1858 = vst [vmem:[#allocation2 + $0x18] sm:$0xff] %v1842
        %1859 = vst [vmem:[#allocation2 + $0x20] sm:$0xff] %v1843
        %1860 = vst [vmem:[#allocation2 + $0x28] sm:$0xff] %v1844
        %1861 = vst [vmem:[#allocation2 + $0x30] sm:$0xff] %v1845
        %1862 = vst [vmem:[#allocation2 + $0x38] sm:$0xff] %v1846
        %1863 = vst [vmem:[#allocation2 + $0x40] sm:$0xff] %v1847
        %1864 = vst [vmem:[#allocation2 + $0x48] sm:$0xff] %v1848
        %1865 = vst [vmem:[#allocation2 + $0x50] sm:$0xff] %v1849
        %1866 = vst [vmem:[#allocation2 + $0x58] sm:$0xff] %v1850
        %1867 = vst [vmem:[#allocation2 + $0x60] sm:$0xff] %v1851
        %1868 = vst [vmem:[#allocation2 + $0x68] sm:$0xff] %v1852
        %1869 = vst [vmem:[#allocation2 + $0x70] sm:$0xff] %v1853
        %1870 = vst [vmem:[#allocation2 + $0x78] sm:$0xff] %v1854
        %v1871 = vld [vmem:[#allocation2] sm:$0xff]
        %v1872 = vld [vmem:[#allocation2 + $0x8] sm:$0xff]
        %v1873 = vld [vmem:[#allocation2 + $0x10] sm:$0xff]
        %v1874 = vld [vmem:[#allocation2 + $0x18] sm:$0xff]
        %v1875 = vld [vmem:[#allocation2 + $0x20] sm:$0xff]
        %v1876 = vld [vmem:[#allocation2 + $0x28] sm:$0xff]
        %v1877 = vld [vmem:[#allocation2 + $0x30] sm:$0xff]
        %v1878 = vld [vmem:[#allocation2 + $0x38] sm:$0xff]
        %v1879 = vld [vmem:[#allocation2 + $0x40] sm:$0xff]
        %v1880 = vld [vmem:[#allocation2 + $0x48] sm:$0xff]
        %v1881 = vld [vmem:[#allocation2 + $0x50] sm:$0xff]
        %v1882 = vld [vmem:[#allocation2 + $0x58] sm:$0xff]
        %v1883 = vld [vmem:[#allocation2 + $0x60] sm:$0xff]
        %v1884 = vld [vmem:[#allocation2 + $0x68] sm:$0xff]
        %v1885 = vld [vmem:[#allocation2 + $0x70] sm:$0xff]
        %v1886 = vld [vmem:[#allocation2 + $0x78] sm:$0xff]
        %v1887 = vld [vmem:[%s213] sm:$0x1]
        %v1889 = vperm.slane %v1887, 0
        %v1891 = vadd.f32 %v1871, %v1889
        %v1892 = vadd.f32 %v1872, %v1889
        %v1893 = vadd.f32 %v1873, %v1889
        %v1894 = vadd.f32 %v1874, %v1889
        %v1895 = vadd.f32 %v1875, %v1889
        %v1896 = vadd.f32 %v1876, %v1889
        %v1897 = vadd.f32 %v1877, %v1889
        %v1898 = vadd.f32 %v1878, %v1889
        %v1899 = vadd.f32 %v1879, %v1889
        %v1900 = vadd.f32 %v1880, %v1889
        %v1901 = vadd.f32 %v1881, %v1889
        %v1902 = vadd.f32 %v1882, %v1889
        %v1903 = vadd.f32 %v1883, %v1889
        %v1904 = vadd.f32 %v1884, %v1889
        %v1905 = vadd.f32 %v1885, %v1889
        %v1906 = vadd.f32 %v1886, %v1889
        %v1907 = vsub.f32 0.0, %v1891
        %v1908 = vsub.f32 0.0, %v1892
        %v1909 = vsub.f32 0.0, %v1893
        %v1910 = vsub.f32 0.0, %v1894
        %v1911 = vsub.f32 0.0, %v1895
        %v1912 = vsub.f32 0.0, %v1896
        %v1913 = vsub.f32 0.0, %v1897
        %v1914 = vsub.f32 0.0, %v1898
        %v1915 = vsub.f32 0.0, %v1899
        %v1916 = vsub.f32 0.0, %v1900
        %v1917 = vsub.f32 0.0, %v1901
        %v1918 = vsub.f32 0.0, %v1902
        %v1919 = vsub.f32 0.0, %v1903
        %v1920 = vsub.f32 0.0, %v1904
        %v1921 = vsub.f32 0.0, %v1905
        %v1922 = vsub.f32 0.0, %v1906
        %v1923 = vmul.f32 %v1907, 1.442695
        %v1924 = vpow.pop %v1923
        %v1925 = vmul.f32 %v1908, 1.442695
        %v1926 = vpow.pop %v1925
        %v1927 = vmul.f32 %v1909, 1.442695
        %v1928 = vpow.pop %v1927
        %v1929 = vmul.f32 %v1910, 1.442695
        %v1930 = vpow.pop %v1929
        %v1931 = vmul.f32 %v1911, 1.442695
        %v1932 = vpow.pop %v1931
        %v1933 = vmul.f32 %v1912, 1.442695
        %v1934 = vpow.pop %v1933
        %v1935 = vmul.f32 %v1913, 1.442695
        %v1936 = vpow.pop %v1935
        %v1937 = vmul.f32 %v1914, 1.442695
        %v1938 = vpow.pop %v1937
        %v1939 = vmul.f32 %v1915, 1.442695
        %v1940 = vpow.pop %v1939
        %v1941 = vmul.f32 %v1916, 1.442695
        %v1942 = vpow.pop %v1941
        %v1943 = vmul.f32 %v1917, 1.442695
        %v1944 = vpow.pop %v1943
        %v1945 = vmul.f32 %v1918, 1.442695
        %v1946 = vpow.pop %v1945
        %v1947 = vmul.f32 %v1919, 1.442695
        %v1948 = vpow.pop %v1947
        %v1949 = vmul.f32 %v1920, 1.442695
        %v1950 = vpow.pop %v1949
        %v1951 = vmul.f32 %v1921, 1.442695
        %v1952 = vpow.pop %v1951
        %v1953 = vmul.f32 %v1922, 1.442695
        %v1954 = vpow.pop %v1953
        %v1955 = vadd.f32 %v1924, 1.0
        %v1956 = vadd.f32 %v1926, 1.0
        %v1957 = vadd.f32 %v1928, 1.0
        %v1958 = vadd.f32 %v1930, 1.0
        %v1959 = vadd.f32 %v1932, 1.0
        %v1960 = vadd.f32 %v1934, 1.0
        %v1961 = vadd.f32 %v1936, 1.0
        %v1962 = vadd.f32 %v1938, 1.0
        %v1963 = vadd.f32 %v1940, 1.0
        %v1964 = vadd.f32 %v1942, 1.0
        %v1965 = vadd.f32 %v1944, 1.0
        %v1966 = vadd.f32 %v1946, 1.0
        %v1967 = vadd.f32 %v1948, 1.0
        %v1968 = vadd.f32 %v1950, 1.0
        %v1969 = vadd.f32 %v1952, 1.0
        %v1970 = vadd.f32 %v1954, 1.0
        %v1971 = vrcp.pop %v1955
        %v1972 = vmul.f32 %v1955, %v1971
        %v1973 = vsub.f32 1.0, %v1972
        %v1974 = vmul.f32 %v1971, %v1973
        %v1975 = vadd.f32 %v1971, %v1974
        %vm1976 = vweird.f32 %v1955
        %vm1977 = vweird.f32 %v1971
        %vm1978 = vmor %vm1976, %vm1977
        %v1979 = vsel %vm1978, %v1971, %v1975
        %v1980 = vand.u32 2147483647, %v1955
        %vm1981 = vcmp.eq.f32.partialorder %v1980, 8.507059e+37
        %v1982 = vand.u32 %v1955, 2147483648
        %v1983 = vor.u32 1.1754944e-38, %v1982
        %v1984 = vsel %vm1981, %v1983, %v1979
        %v1985 = vmul.f32 1.0, %v1984
        %v1986 = vrcp.pop %v1956
        %v1987 = vmul.f32 %v1956, %v1986
        %v1988 = vsub.f32 1.0, %v1987
        %v1989 = vmul.f32 %v1986, %v1988
        %v1990 = vadd.f32 %v1986, %v1989
        %vm1991 = vweird.f32 %v1956
        %vm1992 = vweird.f32 %v1986
        %vm1993 = vmor %vm1991, %vm1992
        %v1994 = vsel %vm1993, %v1986, %v1990
        %v1995 = vand.u32 2147483647, %v1956
        %vm1996 = vcmp.eq.f32.partialorder %v1995, 8.507059e+37
        %v1997 = vand.u32 %v1956, 2147483648
        %v1998 = vor.u32 1.1754944e-38, %v1997
        %v1999 = vsel %vm1996, %v1998, %v1994
        %v2000 = vmul.f32 1.0, %v1999
        %v2001 = vrcp.pop %v1957
        %v2002 = vmul.f32 %v1957, %v2001
        %v2003 = vsub.f32 1.0, %v2002
        %v2004 = vmul.f32 %v2001, %v2003
        %v2005 = vadd.f32 %v2001, %v2004
        %vm2006 = vweird.f32 %v1957
        %vm2007 = vweird.f32 %v2001
        %vm2008 = vmor %vm2006, %vm2007
        %v2009 = vsel %vm2008, %v2001, %v2005
        %v2010 = vand.u32 2147483647, %v1957
        %vm2011 = vcmp.eq.f32.partialorder %v2010, 8.507059e+37
        %v2012 = vand.u32 %v1957, 2147483648
        %v2013 = vor.u32 1.1754944e-38, %v2012
        %v2014 = vsel %vm2011, %v2013, %v2009
        %v2015 = vmul.f32 1.0, %v2014
        %v2016 = vrcp.pop %v1958
        %v2017 = vmul.f32 %v1958, %v2016
        %v2018 = vsub.f32 1.0, %v2017
        %v2019 = vmul.f32 %v2016, %v2018
        %v2020 = vadd.f32 %v2016, %v2019
        %vm2021 = vweird.f32 %v1958
        %vm2022 = vweird.f32 %v2016
        %vm2023 = vmor %vm2021, %vm2022
        %v2024 = vsel %vm2023, %v2016, %v2020
        %v2025 = vand.u32 2147483647, %v1958
        %vm2026 = vcmp.eq.f32.partialorder %v2025, 8.507059e+37
        %v2027 = vand.u32 %v1958, 2147483648
        %v2028 = vor.u32 1.1754944e-38, %v2027
        %v2029 = vsel %vm2026, %v2028, %v2024
        %v2030 = vmul.f32 1.0, %v2029
        %v2031 = vrcp.pop %v1959
        %v2032 = vmul.f32 %v1959, %v2031
        %v2033 = vsub.f32 1.0, %v2032
        %v2034 = vmul.f32 %v2031, %v2033
        %v2035 = vadd.f32 %v2031, %v2034
        %vm2036 = vweird.f32 %v1959
        %vm2037 = vweird.f32 %v2031
        %vm2038 = vmor %vm2036, %vm2037
        %v2039 = vsel %vm2038, %v2031, %v2035
        %v2040 = vand.u32 2147483647, %v1959
        %vm2041 = vcmp.eq.f32.partialorder %v2040, 8.507059e+37
        %v2042 = vand.u32 %v1959, 2147483648
        %v2043 = vor.u32 1.1754944e-38, %v2042
        %v2044 = vsel %vm2041, %v2043, %v2039
        %v2045 = vmul.f32 1.0, %v2044
        %v2046 = vrcp.pop %v1960
        %v2047 = vmul.f32 %v1960, %v2046
        %v2048 = vsub.f32 1.0, %v2047
        %v2049 = vmul.f32 %v2046, %v2048
        %v2050 = vadd.f32 %v2046, %v2049
        %vm2051 = vweird.f32 %v1960
        %vm2052 = vweird.f32 %v2046
        %vm2053 = vmor %vm2051, %vm2052
        %v2054 = vsel %vm2053, %v2046, %v2050
        %v2055 = vand.u32 2147483647, %v1960
        %vm2056 = vcmp.eq.f32.partialorder %v2055, 8.507059e+37
        %v2057 = vand.u32 %v1960, 2147483648
        %v2058 = vor.u32 1.1754944e-38, %v2057
        %v2059 = vsel %vm2056, %v2058, %v2054
        %v2060 = vmul.f32 1.0, %v2059
        %v2061 = vrcp.pop %v1961
        %v2062 = vmul.f32 %v1961, %v2061
        %v2063 = vsub.f32 1.0, %v2062
        %v2064 = vmul.f32 %v2061, %v2063
        %v2065 = vadd.f32 %v2061, %v2064
        %vm2066 = vweird.f32 %v1961
        %vm2067 = vweird.f32 %v2061
        %vm2068 = vmor %vm2066, %vm2067
        %v2069 = vsel %vm2068, %v2061, %v2065
        %v2070 = vand.u32 2147483647, %v1961
        %vm2071 = vcmp.eq.f32.partialorder %v2070, 8.507059e+37
        %v2072 = vand.u32 %v1961, 2147483648
        %v2073 = vor.u32 1.1754944e-38, %v2072
        %v2074 = vsel %vm2071, %v2073, %v2069
        %v2075 = vmul.f32 1.0, %v2074
        %v2076 = vrcp.pop %v1962
        %v2077 = vmul.f32 %v1962, %v2076
        %v2078 = vsub.f32 1.0, %v2077
        %v2079 = vmul.f32 %v2076, %v2078
        %v2080 = vadd.f32 %v2076, %v2079
        %vm2081 = vweird.f32 %v1962
        %vm2082 = vweird.f32 %v2076
        %vm2083 = vmor %vm2081, %vm2082
        %v2084 = vsel %vm2083, %v2076, %v2080
        %v2085 = vand.u32 2147483647, %v1962
        %vm2086 = vcmp.eq.f32.partialorder %v2085, 8.507059e+37
        %v2087 = vand.u32 %v1962, 2147483648
        %v2088 = vor.u32 1.1754944e-38, %v2087
        %v2089 = vsel %vm2086, %v2088, %v2084
        %v2090 = vmul.f32 1.0, %v2089
        %v2091 = vrcp.pop %v1963
        %v2092 = vmul.f32 %v1963, %v2091
        %v2093 = vsub.f32 1.0, %v2092
        %v2094 = vmul.f32 %v2091, %v2093
        %v2095 = vadd.f32 %v2091, %v2094
        %vm2096 = vweird.f32 %v1963
        %vm2097 = vweird.f32 %v2091
        %vm2098 = vmor %vm2096, %vm2097
        %v2099 = vsel %vm2098, %v2091, %v2095
        %v2100 = vand.u32 2147483647, %v1963
        %vm2101 = vcmp.eq.f32.partialorder %v2100, 8.507059e+37
        %v2102 = vand.u32 %v1963, 2147483648
        %v2103 = vor.u32 1.1754944e-38, %v2102
        %v2104 = vsel %vm2101, %v2103, %v2099
        %v2105 = vmul.f32 1.0, %v2104
        %v2106 = vrcp.pop %v1964
        %v2107 = vmul.f32 %v1964, %v2106
        %v2108 = vsub.f32 1.0, %v2107
        %v2109 = vmul.f32 %v2106, %v2108
        %v2110 = vadd.f32 %v2106, %v2109
        %vm2111 = vweird.f32 %v1964
        %vm2112 = vweird.f32 %v2106
        %vm2113 = vmor %vm2111, %vm2112
        %v2114 = vsel %vm2113, %v2106, %v2110
        %v2115 = vand.u32 2147483647, %v1964
        %vm2116 = vcmp.eq.f32.partialorder %v2115, 8.507059e+37
        %v2117 = vand.u32 %v1964, 2147483648
        %v2118 = vor.u32 1.1754944e-38, %v2117
        %v2119 = vsel %vm2116, %v2118, %v2114
        %v2120 = vmul.f32 1.0, %v2119
        %v2121 = vrcp.pop %v1965
        %v2122 = vmul.f32 %v1965, %v2121
        %v2123 = vsub.f32 1.0, %v2122
        %v2124 = vmul.f32 %v2121, %v2123
        %v2125 = vadd.f32 %v2121, %v2124
        %vm2126 = vweird.f32 %v1965
        %vm2127 = vweird.f32 %v2121
        %vm2128 = vmor %vm2126, %vm2127
        %v2129 = vsel %vm2128, %v2121, %v2125
        %v2130 = vand.u32 2147483647, %v1965
        %vm2131 = vcmp.eq.f32.partialorder %v2130, 8.507059e+37
        %v2132 = vand.u32 %v1965, 2147483648
        %v2133 = vor.u32 1.1754944e-38, %v2132
        %v2134 = vsel %vm2131, %v2133, %v2129
        %v2135 = vmul.f32 1.0, %v2134
        %v2136 = vrcp.pop %v1966
        %v2137 = vmul.f32 %v1966, %v2136
        %v2138 = vsub.f32 1.0, %v2137
        %v2139 = vmul.f32 %v2136, %v2138
        %v2140 = vadd.f32 %v2136, %v2139
        %vm2141 = vweird.f32 %v1966
        %vm2142 = vweird.f32 %v2136
        %vm2143 = vmor %vm2141, %vm2142
        %v2144 = vsel %vm2143, %v2136, %v2140
        %v2145 = vand.u32 2147483647, %v1966
        %vm2146 = vcmp.eq.f32.partialorder %v2145, 8.507059e+37
        %v2147 = vand.u32 %v1966, 2147483648
        %v2148 = vor.u32 1.1754944e-38, %v2147
        %v2149 = vsel %vm2146, %v2148, %v2144
        %v2150 = vmul.f32 1.0, %v2149
        %v2151 = vrcp.pop %v1967
        %v2152 = vmul.f32 %v1967, %v2151
        %v2153 = vsub.f32 1.0, %v2152
        %v2154 = vmul.f32 %v2151, %v2153
        %v2155 = vadd.f32 %v2151, %v2154
        %vm2156 = vweird.f32 %v1967
        %vm2157 = vweird.f32 %v2151
        %vm2158 = vmor %vm2156, %vm2157
        %v2159 = vsel %vm2158, %v2151, %v2155
        %v2160 = vand.u32 2147483647, %v1967
        %vm2161 = vcmp.eq.f32.partialorder %v2160, 8.507059e+37
        %v2162 = vand.u32 %v1967, 2147483648
        %v2163 = vor.u32 1.1754944e-38, %v2162
        %v2164 = vsel %vm2161, %v2163, %v2159
        %v2165 = vmul.f32 1.0, %v2164
        %v2166 = vrcp.pop %v1968
        %v2167 = vmul.f32 %v1968, %v2166
        %v2168 = vsub.f32 1.0, %v2167
        %v2169 = vmul.f32 %v2166, %v2168
        %v2170 = vadd.f32 %v2166, %v2169
        %vm2171 = vweird.f32 %v1968
        %vm2172 = vweird.f32 %v2166
        %vm2173 = vmor %vm2171, %vm2172
        %v2174 = vsel %vm2173, %v2166, %v2170
        %v2175 = vand.u32 2147483647, %v1968
        %vm2176 = vcmp.eq.f32.partialorder %v2175, 8.507059e+37
        %v2177 = vand.u32 %v1968, 2147483648
        %v2178 = vor.u32 1.1754944e-38, %v2177
        %v2179 = vsel %vm2176, %v2178, %v2174
        %v2180 = vmul.f32 1.0, %v2179
        %v2181 = vrcp.pop %v1969
        %v2182 = vmul.f32 %v1969, %v2181
        %v2183 = vsub.f32 1.0, %v2182
        %v2184 = vmul.f32 %v2181, %v2183
        %v2185 = vadd.f32 %v2181, %v2184
        %vm2186 = vweird.f32 %v1969
        %vm2187 = vweird.f32 %v2181
        %vm2188 = vmor %vm2186, %vm2187
        %v2189 = vsel %vm2188, %v2181, %v2185
        %v2190 = vand.u32 2147483647, %v1969
        %vm2191 = vcmp.eq.f32.partialorder %v2190, 8.507059e+37
        %v2192 = vand.u32 %v1969, 2147483648
        %v2193 = vor.u32 1.1754944e-38, %v2192
        %v2194 = vsel %vm2191, %v2193, %v2189
        %v2195 = vmul.f32 1.0, %v2194
        %v2196 = vrcp.pop %v1970
        %v2197 = vmul.f32 %v1970, %v2196
        %v2198 = vsub.f32 1.0, %v2197
        %v2199 = vmul.f32 %v2196, %v2198
        %v2200 = vadd.f32 %v2196, %v2199
        %vm2201 = vweird.f32 %v1970
        %vm2202 = vweird.f32 %v2196
        %vm2203 = vmor %vm2201, %vm2202
        %v2204 = vsel %vm2203, %v2196, %v2200
        %v2205 = vand.u32 2147483647, %v1970
        %vm2206 = vcmp.eq.f32.partialorder %v2205, 8.507059e+37
        %v2207 = vand.u32 %v1970, 2147483648
        %v2208 = vor.u32 1.1754944e-38, %v2207
        %v2209 = vsel %vm2206, %v2208, %v2204
        %v2210 = vmul.f32 1.0, %v2209
        %v2211 = vmul.f32 %v1891, %v1985
        %v2212 = vmul.f32 %v1892, %v2000
        %v2213 = vmul.f32 %v1893, %v2015
        %v2214 = vmul.f32 %v1894, %v2030
        %v2215 = vmul.f32 %v1895, %v2045
        %v2216 = vmul.f32 %v1896, %v2060
        %v2217 = vmul.f32 %v1897, %v2075
        %v2218 = vmul.f32 %v1898, %v2090
        %v2219 = vmul.f32 %v1899, %v2105
        %v2220 = vmul.f32 %v1900, %v2120
        %v2221 = vmul.f32 %v1901, %v2135
        %v2222 = vmul.f32 %v1902, %v2150
        %v2223 = vmul.f32 %v1903, %v2165
        %v2224 = vmul.f32 %v1904, %v2180
        %v2225 = vmul.f32 %v1905, %v2195
        %v2226 = vmul.f32 %v1906, %v2210
        %2227 = vst [vmem:[%s201] sm:$0xff] %v2211
        %2228 = vst [vmem:[%s201 + $0x8] sm:$0xff] %v2212
        %2229 = vst [vmem:[%s201 + $0x10] sm:$0xff] %v2213
        %2230 = vst [vmem:[%s201 + $0x18] sm:$0xff] %v2214
        %2231 = vst [vmem:[%s201 + $0x20] sm:$0xff] %v2215
        %2232 = vst [vmem:[%s201 + $0x28] sm:$0xff] %v2216
        %2233 = vst [vmem:[%s201 + $0x30] sm:$0xff] %v2217
        %2234 = vst [vmem:[%s201 + $0x38] sm:$0xff] %v2218
        %2235 = vst [vmem:[%s201 + $0x40] sm:$0xff] %v2219
        %2236 = vst [vmem:[%s201 + $0x48] sm:$0xff] %v2220
        %2237 = vst [vmem:[%s201 + $0x50] sm:$0xff] %v2221
        %2238 = vst [vmem:[%s201 + $0x58] sm:$0xff] %v2222
        %2239 = vst [vmem:[%s201 + $0x60] sm:$0xff] %v2223
        %2240 = vst [vmem:[%s201 + $0x68] sm:$0xff] %v2224
        %2241 = vst [vmem:[%s201 + $0x70] sm:$0xff] %v2225
        %2242 = vst [vmem:[%s201 + $0x78] sm:$0xff] %v2226
        %s2243 = sand.u32 %s117, 1
        %s2244 = scalar_lea.sflag [#allocation4], %s2243
        %s2245 = sand.u32 %s117, 1
        %s2246 = smul.addr %s2245, 128
        %s2247 = scalar_lea.vmem [#allocation3], %s2246
        // Predicated region
        $region33: #{tpu_custom_call.1} parent=31 // pred_check
          %p2248 = pneg %p127
        $region34: #{tpu_custom_call.1} parent=31 // pred_check_branch
          %2250 = sbr.rel (%p2248) target = $region36
        $region35: #{tpu_custom_call.1} parent=31 // pred_region
          %2252 = vsyncadd %s2244, 0
          %s2253 = smul.addr %s21, 16
          %s2254 = sadd.s32 %s22, %s2253
          %s2255 = smul.addr %s2254, 8
          %s2256 = scalar_lea.hbm %s3, %s2255
          %s2257 = sshll.u32 %s2247, 4
          %s2258 = int_to_ptr.vmem [resolvable:$true] %s2257
          %s2259 = sshll.u32 %s2256, 4
          %s2260 = int_to_ptr.hbm [resolvable:$true] %s2259
          %2265 = dma.vmem_to_hbm [thread:$0]  %s2258, 2048, %s2260, %s2244, 128, 128, 8
        $region36: #{tpu_custom_call.1} parent=31 // pred_fallthru
          _
      $region32: #{tpu_custom_call.1} parent=5 // pred_fallthru
        _
      %p2266 = scmp.le.s32.totalorder 2, %s12
      // Predicated region
      $region37: #{tpu_custom_call.1} parent=5 // pred_check
        %p2267 = pneg %p2266
      $region38: #{tpu_custom_call.1} parent=5 // pred_check_branch
        %2269 = sbr.rel (%p2267) target = $region40
      $region39: #{tpu_custom_call.1} parent=5 // pred_region
        %s2270 = ssub.s32 %s12, 2
        // Predicated region
        $region41: #{tpu_custom_call.1} parent=39 // pred_check
          %p2271 = pneg %p133
        $region42: #{tpu_custom_call.1} parent=39 // pred_check_branch
          %2273 = sbr.rel (%p2271) target = $region44
        $region43: #{tpu_custom_call.1} parent=39 // pred_region
          %s2274 = sand.u32 %s118, 1
          %s2275 = scalar_lea.sflag [#allocation4], %s2274
          %s2276 = sand.u32 %s118, 1
          %s2277 = smul.addr %s2276, 128
          %s2278 = scalar_lea.vmem [#allocation3], %s2277
          %2280 = dma.done %s2275, 2048
        $region44: #{tpu_custom_call.1} parent=39 // pred_fallthru
          _
      $region40: #{tpu_custom_call.1} parent=5 // pred_fallthru
        _
    $region6: #{tpu_custom_call.1} parent=1 // loop_footer
      %s16 = sadd.s32 1, %s12
    $region7: #{tpu_custom_call.1} parent=1 // loop_footer_branch
      %11 = sbr.rel target = $region3
    $region8: #{tpu_custom_call.1} parent=1 // loop_exit
      _
    %2281 = vsyncpa [#allocation4], 1
    %s2282 = scalar_lea.sflag [#allocation4], 1
    %2283 = vsyncpa %s2282, 1

</llo_original>
